<compile_context>
chip_gen: v5e
topology: v5e:2x2
jax: 0.10.0
libtpu: 0.0.40
codegen_flags: <defaults>
</compile_context>

<pallas_src>
import functools

import numpy as np
import jax
import jax.numpy as jnp
from jax import lax
from jax.experimental import pallas as pl
from jax.experimental.pallas import tpu as pltpu

_VMEM_LIMIT_BYTES = 48 * 1024 * 1024   # fits v7x (64 MiB phys), headroom on v5e/v6e
_LANE = 128
_SUBLANE = 8


# ----------------------------------------------------------------------------
# Glue helpers (plain JAX)
# ----------------------------------------------------------------------------
def _interp_matrix(out_size, in_size):
    """Interpolation matrix matching F.interpolate(mode='bilinear', align_corners=True)."""
    m = np.zeros((out_size, in_size), np.float32)
    if in_size == 1 or out_size == 1:
        m[:, 0] = 1.0
        return jnp.asarray(m)
    src = np.arange(out_size, dtype=np.float64) * (in_size - 1) / (out_size - 1)
    i0 = np.clip(np.floor(src).astype(np.int64), 0, in_size - 1)
    i1 = np.minimum(i0 + 1, in_size - 1)
    w1 = (src - i0).astype(np.float32)
    m[np.arange(out_size), i0] += 1.0 - w1
    m[np.arange(out_size), i1] += w1
    return jnp.asarray(m)


def upsample_bilinear_align_corners(x, out_h, out_w):
    """Matmul form of the align_corners=True bilinear resize (MXU-friendly, no gathers)."""
    _, _, h, w = x.shape
    if (h, w) == (out_h, out_w):
        return x
    rh = _interp_matrix(out_h, h)
    rw = _interp_matrix(out_w, w)
    hp = lax.Precision.HIGHEST
    y = jnp.einsum('ph,bchw->bcpw', rh, x, precision=hp)
    y = jnp.einsum('qw,bcpw->bcpq', rw, y, precision=hp)
    return y


def _choose_rows_per_tile(h, w, max_lanes=2048):
    """Largest row count whose tile (rows*W lanes) is a multiple of 128 and <= max_lanes."""
    best = None
    for r in range(1, h + 1):
        if h % r:
            continue
        t = r * w
        if t % _LANE == 0 and t <= max_lanes:
            best = r
    return best if best is not None else h   # fall back to one tile per image


# ----------------------------------------------------------------------------
# Pass 1: 3x3 conv (+folded BN, ReLU) -> 1x1 conv (+folded BN, ReLU) -> SE pool
# Layout: channels on sublanes, pixels (whole rows) on lanes.
# ----------------------------------------------------------------------------
def _conv1_se_pool_kernel(xm_ref, hup_ref, hdn_ref,
                          w1_ref, b1a_ref, w1b_ref, b1b_ref,
                          h2_ref, sum_ref):
    t = pl.program_id(1)
    tile = xm_ref.shape[1]            # rows_per_tile * W lanes
    width = hup_ref.shape[-1]         # W
    f32 = jnp.float32

    m = xm_ref[...]                                            # (Cin, T) bf16
    # Rows shifted one up / one down; the pre-built halo row (zero at the image
    # border) fills the first / last row of the tile.
    v_up = jnp.concatenate([hup_ref[...], m[:, :tile - width]], axis=1)
    v_dn = jnp.concatenate([m[:, width:], hdn_ref[...]], axis=1)

    def mm(k, v):                                              # (Cmid,Cin)@(Cin,T)
        return jnp.dot(w1_ref[k], v, preferred_element_type=f32)

    # 3x3 conv = nine K=Cin matmuls.  Taps grouped per kernel column; the
    # horizontal +-1 shifts are applied to the Cmid-wide partial sums.
    s_l = mm(0, v_up) + mm(3, m) + mm(6, v_dn)                 # kernel col 0 (left)
    s_c = mm(1, v_up) + mm(4, m) + mm(7, v_dn)                 # kernel col 1 (center)
    s_r = mm(2, v_up) + mm(5, m) + mm(8, v_dn)                 # kernel col 2 (right)

    col = lax.broadcasted_iota(jnp.int32, s_c.shape, 1) % width
    left = jnp.concatenate([s_l[:, tile - 1:], s_l[:, :tile - 1]], axis=1)   # s_l[p-1]
    right = jnp.concatenate([s_r[:, 1:], s_r[:, :1]], axis=1)                # s_r[p+1]
    h1 = s_c + jnp.where(col != 0, left, 0.0) + jnp.where(col != width - 1, right, 0.0)
    h1 = jnp.maximum(h1 + b1a_ref[...], 0.0)                   # (Cmid, T) f32

    # conv1[3]: 1x1 conv + folded BN + ReLU
    h2 = jnp.dot(w1b_ref[...], h1.astype(jnp.bfloat16), preferred_element_type=f32)
    h2 = jnp.maximum(h2 + b1b_ref[...], 0.0)                   # (Cmid, T) f32

    h2_ref[...] = h2.astype(h2_ref.dtype)                      # bf16 write-back

    # SE global-average-pool: exact, accumulated across the HW ("arbitrary") axis.
    @pl.when(t == 0)
    def _():
        sum_ref[...] = jnp.zeros_like(sum_ref)
    sum_ref[...] += jnp.sum(h2, axis=1, keepdims=True)


# ----------------------------------------------------------------------------
# Pass 2: apply the SE gate, emit xfuse (bf16) and conv2 logits.
# The gate is folded into the conv2 weight:  w2 @ (g*h2) == (w2*g^T) @ h2.
# ----------------------------------------------------------------------------
def _se_scale_conv2_kernel(h2_ref, gcol_ref, grow_ref, w2_ref, b2_ref,
                           xfuse_ref, out_ref):
    f32 = jnp.float32
    h2 = h2_ref[...]                                           # (Cmid, T) bf16
    g_col = gcol_ref[...]                                      # (Cmid, 1) f32

    xf = h2.astype(f32) * g_col
    xfuse_ref[...] = xf.astype(xfuse_ref.dtype)

    wg = (w2_ref[...].astype(f32) * grow_ref[...]).astype(jnp.bfloat16)   # (CLSp, Cmid)
    out = jnp.dot(wg, h2, preferred_element_type=f32) + b2_ref[...]
    out_ref[...] = out.astype(out_ref.dtype)


# ----------------------------------------------------------------------------
# Forward pass wrapper
# ----------------------------------------------------------------------------
def alpha_hb_decoder_forward(x, skip, params, *, rows_per_tile=None):
    """x: (B, Cin, h', w'), skip: (B, Cin, H, W) -> (output, xfuse) in NCHW."""
    B, cin, H, W = skip.shape
    w1_full = params["w1"]                       # (Cmid, Cin, 3, 3) folded BN, f32
    cmid = w1_full.shape[0]
    cls_out = params["w2"].shape[0]
    HW = H * W

    if rows_per_tile is None:
        rows_per_tile = _choose_rows_per_tile(H, W)
    R = rows_per_tile
    assert H % R == 0, "rows_per_tile must divide H"
    nT = H // R
    T = R * W
    assert nT == 1 or T % _LANE == 0, "tile lane width must be a multiple of 128"

    # --- glue: matmul-based upsample + alpha fusion (XLA fuses these) -------
    xup = upsample_bilinear_align_corners(x, H, W)
    xf = (xup + params["alpha"][0] * skip).astype(jnp.bfloat16)      # (B,Cin,H,W)
    xf_flat = xf.reshape(B, cin, HW)

    # tiny halo arrays: the row just above / below each tile (zeros at borders)
    zrow = jnp.zeros((B, cin, 1, W), jnp.bfloat16)
    up = jnp.concatenate([zrow, xf[:, :, R - 1:H - 1:R, :]], axis=2)  # (B,Cin,nT,W)
    dn = jnp.concatenate([xf[:, :, R:H:R, :], zrow], axis=2)
    halo_up = jnp.transpose(up, (0, 2, 1, 3))                         # (B,nT,Cin,W)
    halo_dn = jnp.transpose(dn, (0, 2, 1, 3))

    # packed / bf16 parameters (w1[3*ky+kx] = folded_weight[:, :, ky, kx])
    w1p = jnp.transpose(w1_full, (2, 3, 0, 1)).reshape(9, cmid, cin).astype(jnp.bfloat16)
    w1b = params["w1b"].astype(jnp.bfloat16)
    b1a, b1b = params["b1a"], params["b1b"]

    cls_pad = max(_SUBLANE, ((cls_out + _SUBLANE - 1) // _SUBLANE) * _SUBLANE)
    w2p = jnp.zeros((cls_pad, cmid), jnp.float32).at[:cls_out].set(params["w2"])
    w2p = w2p.astype(jnp.bfloat16)
    b2p = jnp.zeros((cls_pad, 1), jnp.float32).at[:cls_out].set(params["b2"])

    # ---------------------------- pass 1 ------------------------------------
    h2, sums = pl.pallas_call(
        _conv1_se_pool_kernel,
        out_shape=(jax.ShapeDtypeStruct((B, cmid, HW), jnp.bfloat16),
                   jax.ShapeDtypeStruct((B, cmid, 1), jnp.float32)),
        grid=(B, nT),
        in_specs=[
            pl.BlockSpec((None, cin, T), lambda b, t: (b, 0, t)),        # image tile
            pl.BlockSpec((None, None, cin, W), lambda b, t: (b, t, 0, 0)),  # halo above
            pl.BlockSpec((None, None, cin, W), lambda b, t: (b, t, 0, 0)),  # halo below
            pl.BlockSpec((9, cmid, cin), lambda b, t: (0, 0, 0)),        # 3x3 weights
            pl.BlockSpec((cmid, 1), lambda b, t: (0, 0)),                # folded bias 1
            pl.BlockSpec((cmid, cmid), lambda b, t: (0, 0)),             # 1x1 weight
            pl.BlockSpec((cmid, 1), lambda b, t: (0, 0)),                # folded bias 2
        ],
        out_specs=(
            pl.BlockSpec((None, cmid, T), lambda b, t: (b, 0, t)),       # h2 (bf16)
            pl.BlockSpec((None, cmid, 1), lambda b, t: (b, 0, 0)),       # channel sums
        ),
        compiler_params=pltpu.CompilerParams(
            dimension_semantics=("parallel", "arbitrary"),
            vmem_limit_bytes=_VMEM_LIMIT_BYTES),
    )(xf_flat, halo_up, halo_dn, w1p, b1a, w1b, b1b)

    # --- tiny glue: SE excitation (two mat-vecs) stay off the MXU path ------
    hp = lax.Precision.HIGHEST
    mean = sums / float(HW)                                            # (B,Cmid,1)
    z = jnp.maximum(jnp.einsum('rc,bcu->bru', params["wfc1"], mean, precision=hp)
                    + params["bfc1"][None], 0.0)
    g = jax.nn.sigmoid(jnp.einsum('cr,bru->bcu', params["wfc2"], z, precision=hp)
                       + params["bfc2"][None])                         # (B,Cmid,1)
    g_row = jnp.transpose(g, (0, 2, 1))                                # (B,1,Cmid)

    # ---------------------------- pass 2 ------------------------------------
    xfuse, out_p = pl.pallas_call(
        _se_scale_conv2_kernel,
        out_shape=(jax.ShapeDtypeStruct((B, cmid, HW), jnp.bfloat16),
                   jax.ShapeDtypeStruct((B, cls_pad, HW), jnp.float32)),
        grid=(B, nT),
        in_specs=[
            pl.BlockSpec((None, cmid, T), lambda b, t: (b, 0, t)),       # h2 tile
            pl.BlockSpec((None, cmid, 1), lambda b, t: (b, 0, 0)),       # gate (col)
            pl.BlockSpec((None, 1, cmid), lambda b, t: (b, 0, 0)),       # gate (row)
            pl.BlockSpec((cls_pad, cmid), lambda b, t: (0, 0)),          # conv2 weight
            pl.BlockSpec((cls_pad, 1), lambda b, t: (0, 0)),             # conv2 bias
        ],
        out_specs=(
            pl.BlockSpec((None, cmid, T), lambda b, t: (b, 0, t)),
            pl.BlockSpec((None, cls_pad, T), lambda b, t: (b, 0, t)),
        ),
        compiler_params=pltpu.CompilerParams(
            dimension_semantics=("parallel", "parallel"),
            vmem_limit_bytes=_VMEM_LIMIT_BYTES),
    )(h2, g, g_row, w2p, b2p)

    output = out_p[:, :cls_out].reshape(B, cls_out, H, W)
    return output, xfuse.reshape(B, cmid, H, W)


# ----------------------------------------------------------------------------
# Parameters: conv weights with folded InPlaceABNSync(activation='none'), SE, conv2.
# ----------------------------------------------------------------------------
def init_params(key, cin, cmid, reduction, cls_out):
    ks = jax.random.split(key, 10)
    cr = max(cmid // reduction, 1)
    eps = 1e-5

    def wrand(k, shape, scale=0.1):
        return scale * jax.random.normal(k, shape, dtype=jnp.float32)

    def bn(k, c):
        k1, k2, k3, k4 = jax.random.split(k, 4)
        gamma = 1.0 + 0.1 * jax.random.normal(k1, (c,), dtype=jnp.float32)
        beta = 0.1 * jax.random.normal(k2, (c,), dtype=jnp.float32)
        mean = 0.1 * jax.random.normal(k3, (c,), dtype=jnp.float32)
        var = jnp.abs(jax.random.normal(k4, (c,), dtype=jnp.float32)) + 0.5
        return gamma, beta, mean, var

    # conv1[0]: 3x3, no bias, + BN folded
    w1_raw = wrand(ks[0], (cmid, cin, 3, 3))
    g, b, m, v = bn(ks[1], cmid)
    s = g / jnp.sqrt(v + eps)
    w1 = w1_raw * s[:, None, None, None]
    b1a = (b - m * s)[:, None]

    # conv1[3]: 1x1, no bias, + BN folded
    w1b_raw = wrand(ks[2], (cmid, cmid))
    g, b, m, v = bn(ks[3], cmid)
    s = g / jnp.sqrt(v + eps)
    w1b = w1b_raw * s[:, None]
    b1b = (b - m * s)[:, None]

    return dict(
        w1=w1, b1a=b1a, w1b=w1b, b1b=b1b,
        wfc1=wrand(ks[4], (cr, cmid)), bfc1=wrand(ks[5], (cr, 1)),
        wfc2=wrand(ks[6], (cmid, cr)), bfc2=wrand(ks[7], (cmid, 1)),
        w2=wrand(ks[8], (cls_out, cmid)), b2=wrand(ks[9], (cls_out, 1)),
        alpha=jnp.ones((1,), jnp.float32),          # nn.Parameter(torch.ones(1))
    )


# ----------------------------------------------------------------------------
# Independent pure-JAX f32 reference (true module semantics)
# ----------------------------------------------------------------------------
def ref_forward(x, skip, params):
    hp = lax.Precision.HIGHEST
    _, _, H, W = skip.shape
    cmid = params["w1"].shape[0]

    xup = upsample_bilinear_align_corners(x, H, W)
    xf0 = xup + params["alpha"][0] * skip

    h1 = lax.conv_general_dilated(
        xf0, params["w1"], window_strides=(1, 1), padding=((1, 1), (1, 1)),
        dimension_numbers=('NCHW', 'OIHW', 'NCHW'), precision=hp)
    h1 = jnp.maximum(h1 + params["b1a"].reshape(1, cmid, 1, 1), 0.0)

    h2 = jnp.einsum('oc,bchw->bohw', params["w1b"], h1, precision=hp)
    h2 = jnp.maximum(h2 + params["b1b"].reshape(1, cmid, 1, 1), 0.0)

    s = jnp.mean(h2, axis=(2, 3), keepdims=True)
    z = jnp.maximum(jnp.einsum('rc,bcij->brij', params["wfc1"], s, precision=hp)
                    + params["bfc1"].reshape(1, -1, 1, 1), 0.0)
    g = jax.nn.sigmoid(jnp.einsum('cr,brij->bcij', params["wfc2"], z, precision=hp)
                       + params["bfc2"].reshape(1, -1, 1, 1))
    xfuse = h2 * g

    out = (jnp.einsum('oc,bchw->bohw', params["w2"], xfuse, precision=hp)
           + params["b2"].reshape(1, -1, 1, 1))
    return out, xfuse


if __name__ == "__main__":
    # Small shapes consistent with the module (real net: 512 -> 256 channels).
    B = 2
    cin, cmid, reduction, hbody_cls = 64, 32, 16, 3
    h_in, w_in = 8, 8
    h_skip, w_skip = 16, 16

    key = jax.random.PRNGKey(0)
    kx, ksk, kp = jax.random.split(key, 3)
    x = jax.random.normal(kx, (B, cin, h_in, w_in), dtype=jnp.float32)
    skip = jax.random.normal(ksk, (B, cin, h_skip, w_skip), dtype=jnp.float32)
    params = init_params(kp, cin, cmid, reduction, hbody_cls)

    # rows_per_tile=8 -> two HW tiles per image: exercises the halo rows and the
    # cross-tile (two-pass) SE pooling path.
    fwd = jax.jit(functools.partial(alpha_hb_decoder_forward, rows_per_tile=8))
    out, xfuse = fwd(x, skip, params)
    jax.block_until_ready((out, xfuse))

    assert out.shape == (B, hbody_cls, h_skip, w_skip)
    assert xfuse.shape == (B, cmid, h_skip, w_skip)

    ref_out, ref_xfuse = ref_forward(x, skip, params)
    np.testing.assert_allclose(np.asarray(out.astype(jnp.float32)),
                               np.asarray(ref_out), rtol=2e-2, atol=2e-2)
    np.testing.assert_allclose(np.asarray(xfuse.astype(jnp.float32)),
                               np.asarray(ref_xfuse), rtol=2e-2, atol=2e-2)

    print("KERNEL_OK")
</pallas_src>

<mosaic_0001>
module attributes {stable_mosaic.version = 11 : i64} {
  func.func @_conv1_se_pool_kernel(%arg0: i32, %arg1: i32, %arg2: memref<1x64x128xbf16, #tpu.memory_space<vmem>>, %arg3: memref<1x1x64x16xbf16, #tpu.memory_space<vmem>>, %arg4: memref<1x1x64x16xbf16, #tpu.memory_space<vmem>>, %arg5: memref<9x32x64xbf16, #tpu.memory_space<vmem>>, %arg6: memref<32x1xf32, #tpu.memory_space<vmem>>, %arg7: memref<32x32xbf16, #tpu.memory_space<vmem>>, %arg8: memref<32x1xf32, #tpu.memory_space<vmem>>, %arg9: memref<1x32x128xbf16, #tpu.memory_space<vmem>>, %arg10: memref<1x32x1xf32, #tpu.memory_space<vmem>>) attributes {dimension_semantics = [#tpu.dimension_semantics<parallel>, #tpu.dimension_semantics<arbitrary>], iteration_bounds = array<i64: 2, 2>, scalar_prefetch = 0 : i64, scratch_operands = 0 : i64, tpu.core_type = #tpu.core_type<tc>, window_params = [{transform_indices = @transform_0, window_bounds = array<i64: 1, 64, 128>}, {transform_indices = @transform_1, window_bounds = array<i64: 1, 1, 64, 16>}, {transform_indices = @transform_2, window_bounds = array<i64: 1, 1, 64, 16>}, {pipeline_mode = #tpu.pipeline_mode<synchronous>, transform_indices = @transform_3, window_bounds = array<i64: 9, 32, 64>}, {pipeline_mode = #tpu.pipeline_mode<synchronous>, transform_indices = @transform_4, window_bounds = array<i64: 32, 1>}, {pipeline_mode = #tpu.pipeline_mode<synchronous>, transform_indices = @transform_5, window_bounds = array<i64: 32, 32>}, {pipeline_mode = #tpu.pipeline_mode<synchronous>, transform_indices = @transform_6, window_bounds = array<i64: 32, 1>}, {transform_indices = @transform_7, window_bounds = array<i64: 1, 32, 128>}, {transform_indices = @transform_8, window_bounds = array<i64: 1, 32, 1>}]} {
    %c0 = arith.constant 0 : index
    %c0_0 = arith.constant 0 : index
    %c0_1 = arith.constant 0 : index
    %0 = vector.load %arg2[%c0, %c0_0, %c0_1] : memref<1x64x128xbf16, #tpu.memory_space<vmem>>, vector<1x64x128xbf16>
    %1 = vector.shape_cast %0 : vector<1x64x128xbf16> to vector<64x128xbf16>
    %c0_2 = arith.constant 0 : index
    %c0_3 = arith.constant 0 : index
    %c0_4 = arith.constant 0 : index
    %c0_5 = arith.constant 0 : index
    %2 = vector.load %arg3[%c0_2, %c0_3, %c0_4, %c0_5] : memref<1x1x64x16xbf16, #tpu.memory_space<vmem>>, vector<1x1x64x16xbf16>
    %3 = vector.shape_cast %2 : vector<1x1x64x16xbf16> to vector<64x16xbf16>
    %4 = vector.extract_strided_slice %1 {offsets = [0, 0], sizes = [64, 112], strides = [1, 1]} : vector<64x128xbf16> to vector<64x112xbf16>
    %5 = tpu.concatenate %3, %4 in 1 : vector<64x16xbf16>, vector<64x112xbf16> -> vector<64x128xbf16>
    %6 = vector.extract_strided_slice %1 {offsets = [0, 16], sizes = [64, 112], strides = [1, 1]} : vector<64x128xbf16> to vector<64x112xbf16>
    %c0_6 = arith.constant 0 : index
    %c0_7 = arith.constant 0 : index
    %c0_8 = arith.constant 0 : index
    %c0_9 = arith.constant 0 : index
    %7 = vector.load %arg4[%c0_6, %c0_7, %c0_8, %c0_9] : memref<1x1x64x16xbf16, #tpu.memory_space<vmem>>, vector<1x1x64x16xbf16>
    %8 = vector.shape_cast %7 : vector<1x1x64x16xbf16> to vector<64x16xbf16>
    %9 = tpu.concatenate %6, %8 in 1 : vector<64x112xbf16>, vector<64x16xbf16> -> vector<64x128xbf16>
    %c0_10 = arith.constant 0 : index
    %c0_11 = arith.constant 0 : index
    %c0_12 = arith.constant 0 : index
    %10 = vector.load %arg5[%c0_10, %c0_11, %c0_12] : memref<9x32x64xbf16, #tpu.memory_space<vmem>>, vector<1x32x64xbf16>
    %11 = vector.shape_cast %10 : vector<1x32x64xbf16> to vector<32x64xbf16>
    %cst = arith.constant dense<0.000000e+00> : vector<32x128xf32>
    %12 = tpu.matmul %11, %5, %cst {dimension_numbers = #tpu.dot_dimension_numbers<[1], [0], [0], [1], [0, 0, 1, 1], [], []>} : vector<32x64xbf16>, vector<64x128xbf16>, vector<32x128xf32> -> vector<32x128xf32>
    %c3 = arith.constant 3 : index
    %c0_13 = arith.constant 0 : index
    %c0_14 = arith.constant 0 : index
    %13 = vector.load %arg5[%c3, %c0_13, %c0_14] : memref<9x32x64xbf16, #tpu.memory_space<vmem>>, vector<1x32x64xbf16>
    %14 = vector.shape_cast %13 : vector<1x32x64xbf16> to vector<32x64xbf16>
    %cst_15 = arith.constant dense<0.000000e+00> : vector<32x128xf32>
    %15 = tpu.matmul %14, %1, %cst_15 {dimension_numbers = #tpu.dot_dimension_numbers<[1], [0], [0], [1], [0, 0, 1, 1], [], []>} : vector<32x64xbf16>, vector<64x128xbf16>, vector<32x128xf32> -> vector<32x128xf32>
    %16 = arith.addf %12, %15 : vector<32x128xf32>
    %c6 = arith.constant 6 : index
    %c0_16 = arith.constant 0 : index
    %c0_17 = arith.constant 0 : index
    %17 = vector.load %arg5[%c6, %c0_16, %c0_17] : memref<9x32x64xbf16, #tpu.memory_space<vmem>>, vector<1x32x64xbf16>
    %18 = vector.shape_cast %17 : vector<1x32x64xbf16> to vector<32x64xbf16>
    %cst_18 = arith.constant dense<0.000000e+00> : vector<32x128xf32>
    %19 = tpu.matmul %18, %9, %cst_18 {dimension_numbers = #tpu.dot_dimension_numbers<[1], [0], [0], [1], [0, 0, 1, 1], [], []>} : vector<32x64xbf16>, vector<64x128xbf16>, vector<32x128xf32> -> vector<32x128xf32>
    %20 = arith.addf %16, %19 : vector<32x128xf32>
    %c1 = arith.constant 1 : index
    %c0_19 = arith.constant 0 : index
    %c0_20 = arith.constant 0 : index
    %21 = vector.load %arg5[%c1, %c0_19, %c0_20] : memref<9x32x64xbf16, #tpu.memory_space<vmem>>, vector<1x32x64xbf16>
    %22 = vector.shape_cast %21 : vector<1x32x64xbf16> to vector<32x64xbf16>
    %cst_21 = arith.constant dense<0.000000e+00> : vector<32x128xf32>
    %23 = tpu.matmul %22, %5, %cst_21 {dimension_numbers = #tpu.dot_dimension_numbers<[1], [0], [0], [1], [0, 0, 1, 1], [], []>} : vector<32x64xbf16>, vector<64x128xbf16>, vector<32x128xf32> -> vector<32x128xf32>
    %c4 = arith.constant 4 : index
    %c0_22 = arith.constant 0 : index
    %c0_23 = arith.constant 0 : index
    %24 = vector.load %arg5[%c4, %c0_22, %c0_23] : memref<9x32x64xbf16, #tpu.memory_space<vmem>>, vector<1x32x64xbf16>
    %25 = vector.shape_cast %24 : vector<1x32x64xbf16> to vector<32x64xbf16>
    %cst_24 = arith.constant dense<0.000000e+00> : vector<32x128xf32>
    %26 = tpu.matmul %25, %1, %cst_24 {dimension_numbers = #tpu.dot_dimension_numbers<[1], [0], [0], [1], [0, 0, 1, 1], [], []>} : vector<32x64xbf16>, vector<64x128xbf16>, vector<32x128xf32> -> vector<32x128xf32>
    %27 = arith.addf %23, %26 : vector<32x128xf32>
    %c7 = arith.constant 7 : index
    %c0_25 = arith.constant 0 : index
    %c0_26 = arith.constant 0 : index
    %28 = vector.load %arg5[%c7, %c0_25, %c0_26] : memref<9x32x64xbf16, #tpu.memory_space<vmem>>, vector<1x32x64xbf16>
    %29 = vector.shape_cast %28 : vector<1x32x64xbf16> to vector<32x64xbf16>
    %cst_27 = arith.constant dense<0.000000e+00> : vector<32x128xf32>
    %30 = tpu.matmul %29, %9, %cst_27 {dimension_numbers = #tpu.dot_dimension_numbers<[1], [0], [0], [1], [0, 0, 1, 1], [], []>} : vector<32x64xbf16>, vector<64x128xbf16>, vector<32x128xf32> -> vector<32x128xf32>
    %31 = arith.addf %27, %30 : vector<32x128xf32>
    %c2 = arith.constant 2 : index
    %c0_28 = arith.constant 0 : index
    %c0_29 = arith.constant 0 : index
    %32 = vector.load %arg5[%c2, %c0_28, %c0_29] : memref<9x32x64xbf16, #tpu.memory_space<vmem>>, vector<1x32x64xbf16>
    %33 = vector.shape_cast %32 : vector<1x32x64xbf16> to vector<32x64xbf16>
    %cst_30 = arith.constant dense<0.000000e+00> : vector<32x128xf32>
    %34 = tpu.matmul %33, %5, %cst_30 {dimension_numbers = #tpu.dot_dimension_numbers<[1], [0], [0], [1], [0, 0, 1, 1], [], []>} : vector<32x64xbf16>, vector<64x128xbf16>, vector<32x128xf32> -> vector<32x128xf32>
    %c5 = arith.constant 5 : index
    %c0_31 = arith.constant 0 : index
    %c0_32 = arith.constant 0 : index
    %35 = vector.load %arg5[%c5, %c0_31, %c0_32] : memref<9x32x64xbf16, #tpu.memory_space<vmem>>, vector<1x32x64xbf16>
    %36 = vector.shape_cast %35 : vector<1x32x64xbf16> to vector<32x64xbf16>
    %cst_33 = arith.constant dense<0.000000e+00> : vector<32x128xf32>
    %37 = tpu.matmul %36, %1, %cst_33 {dimension_numbers = #tpu.dot_dimension_numbers<[1], [0], [0], [1], [0, 0, 1, 1], [], []>} : vector<32x64xbf16>, vector<64x128xbf16>, vector<32x128xf32> -> vector<32x128xf32>
    %38 = arith.addf %34, %37 : vector<32x128xf32>
    %c8 = arith.constant 8 : index
    %c0_34 = arith.constant 0 : index
    %c0_35 = arith.constant 0 : index
    %39 = vector.load %arg5[%c8, %c0_34, %c0_35] : memref<9x32x64xbf16, #tpu.memory_space<vmem>>, vector<1x32x64xbf16>
    %40 = vector.shape_cast %39 : vector<1x32x64xbf16> to vector<32x64xbf16>
    %cst_36 = arith.constant dense<0.000000e+00> : vector<32x128xf32>
    %41 = tpu.matmul %40, %9, %cst_36 {dimension_numbers = #tpu.dot_dimension_numbers<[1], [0], [0], [1], [0, 0, 1, 1], [], []>} : vector<32x64xbf16>, vector<64x128xbf16>, vector<32x128xf32> -> vector<32x128xf32>
    %42 = arith.addf %38, %41 : vector<32x128xf32>
    %43 = tpu.iota {dimensions = array<i32: 1>} : vector<32x128xi32>
    %c16_i32 = arith.constant 16 : i32
    %c0_i32 = arith.constant 0 : i32
    %44 = arith.cmpi eq, %c16_i32, %c0_i32 : i32
    %c1_i32 = arith.constant 1 : i32
    %45 = arith.select %44, %c1_i32, %c16_i32 : i32
    %46 = vector.broadcast %45 : i32 to vector<32x128xi32>
    %47 = arith.remsi %43, %46 : vector<32x128xi32>
    %c0_i32_37 = arith.constant 0 : i32
    %48 = vector.broadcast %c0_i32_37 : i32 to vector<32x128xi32>
    %49 = arith.cmpi ne, %47, %48 : vector<32x128xi32>
    %c0_i32_38 = arith.constant 0 : i32
    %50 = vector.broadcast %c0_i32_38 : i32 to vector<32x128xi32>
    %51 = arith.cmpi slt, %47, %50 : vector<32x128xi32>
    %c0_i32_39 = arith.constant 0 : i32
    %52 = arith.cmpi slt, %45, %c0_i32_39 : i32
    %53 = vector.broadcast %52 : i1 to vector<32x128xi1>
    %54 = vector.broadcast %53 : vector<32x128xi1> to vector<32x128xi1>
    %55 = arith.xori %51, %54 : vector<32x128xi1>
    %56 = arith.andi %55, %49 : vector<32x128xi1>
    %57 = vector.broadcast %45 : i32 to vector<32x128xi32>
    %58 = arith.addi %47, %57 : vector<32x128xi32>
    %59 = arith.select %56, %58, %47 : vector<32x128xi1>, vector<32x128xi32>
    %60 = vector.extract_strided_slice %20 {offsets = [0, 127], sizes = [32, 1], strides = [1, 1]} : vector<32x128xf32> to vector<32x1xf32>
    %61 = vector.extract_strided_slice %20 {offsets = [0, 0], sizes = [32, 127], strides = [1, 1]} : vector<32x128xf32> to vector<32x127xf32>
    %62 = tpu.concatenate %60, %61 in 1 : vector<32x1xf32>, vector<32x127xf32> -> vector<32x128xf32>
    %63 = vector.extract_strided_slice %42 {offsets = [0, 1], sizes = [32, 127], strides = [1, 1]} : vector<32x128xf32> to vector<32x127xf32>
    %64 = vector.extract_strided_slice %42 {offsets = [0, 0], sizes = [32, 1], strides = [1, 1]} : vector<32x128xf32> to vector<32x1xf32>
    %65 = tpu.concatenate %63, %64 in 1 : vector<32x127xf32>, vector<32x1xf32> -> vector<32x128xf32>
    %c0_i32_40 = arith.constant 0 : i32
    %66 = vector.broadcast %c0_i32_40 : i32 to vector<32x128xi32>
    %67 = arith.cmpi ne, %59, %66 : vector<32x128xi32>
    %cst_41 = arith.constant 0.000000e+00 : f32
    %68 = vector.broadcast %cst_41 : f32 to vector<32x128xf32>
    %69 = arith.select %67, %62, %68 : vector<32x128xi1>, vector<32x128xf32>
    %70 = arith.addf %31, %69 : vector<32x128xf32>
    %c15_i32 = arith.constant 15 : i32
    %71 = vector.broadcast %c15_i32 : i32 to vector<32x128xi32>
    %72 = arith.cmpi ne, %59, %71 : vector<32x128xi32>
    %cst_42 = arith.constant 0.000000e+00 : f32
    %73 = vector.broadcast %cst_42 : f32 to vector<32x128xf32>
    %74 = arith.select %72, %65, %73 : vector<32x128xi1>, vector<32x128xf32>
    %75 = arith.addf %70, %74 : vector<32x128xf32>
    %c0_43 = arith.constant 0 : index
    %c0_44 = arith.constant 0 : index
    %76 = vector.load %arg6[%c0_43, %c0_44] : memref<32x1xf32, #tpu.memory_space<vmem>>, vector<32x1xf32>
    %77 = vector.broadcast %76 : vector<32x1xf32> to vector<32x128xf32>
    %78 = arith.addf %75, %77 : vector<32x128xf32>
    %cst_45 = arith.constant 0.000000e+00 : f32
    %79 = vector.broadcast %cst_45 : f32 to vector<32x128xf32>
    %80 = arith.maximumf %78, %79 : vector<32x128xf32>
    %c0_46 = arith.constant 0 : index
    %c0_47 = arith.constant 0 : index
    %81 = vector.load %arg7[%c0_46, %c0_47] : memref<32x32xbf16, #tpu.memory_space<vmem>>, vector<32x32xbf16>
    %82 = arith.truncf %80 : vector<32x128xf32> to vector<32x128xbf16>
    %cst_48 = arith.constant dense<0.000000e+00> : vector<32x128xf32>
    %83 = tpu.matmul %81, %82, %cst_48 {dimension_numbers = #tpu.dot_dimension_numbers<[1], [0], [0], [1], [0, 0, 1, 1], [], []>} : vector<32x32xbf16>, vector<32x128xbf16>, vector<32x128xf32> -> vector<32x128xf32>
    %c0_49 = arith.constant 0 : index
    %c0_50 = arith.constant 0 : index
    %84 = vector.load %arg8[%c0_49, %c0_50] : memref<32x1xf32, #tpu.memory_space<vmem>>, vector<32x1xf32>
    %85 = vector.broadcast %84 : vector<32x1xf32> to vector<32x128xf32>
    %86 = arith.addf %83, %85 : vector<32x128xf32>
    %cst_51 = arith.constant 0.000000e+00 : f32
    %87 = vector.broadcast %cst_51 : f32 to vector<32x128xf32>
    %88 = arith.maximumf %86, %87 : vector<32x128xf32>
    %89 = arith.truncf %88 : vector<32x128xf32> to vector<32x128xbf16>
    %c0_52 = arith.constant 0 : index
    %c0_53 = arith.constant 0 : index
    %c0_54 = arith.constant 0 : index
    %90 = vector.load %arg9[%c0_52, %c0_53, %c0_54] : memref<1x32x128xbf16, #tpu.memory_space<vmem>>, vector<1x32x128xbf16>
    %91 = vector.shape_cast %90 : vector<1x32x128xbf16> to vector<32x128xbf16>
    %92 = vector.shape_cast %89 : vector<32x128xbf16> to vector<1x32x128xbf16>
    tpu.vector_store %arg9[%c0_52, %c0_53, %c0_54], %92 {strides = array<i32>} : memref<1x32x128xbf16, #tpu.memory_space<vmem>>, vector<1x32x128xbf16>,
    %c0_i32_55 = arith.constant 0 : i32
    %93 = arith.cmpi eq, %arg1, %c0_i32_55 : i32
    %94 = arith.extui %93 : i1 to i32
    %c0_i32_56 = arith.constant 0 : i32
    %95 = arith.cmpi ne, %94, %c0_i32_56 : i32
    scf.if %95 {
      %cst_64 = arith.constant 0.000000e+00 : f32
      %104 = vector.broadcast %cst_64 : f32 to vector<32x1xf32>
      %c0_65 = arith.constant 0 : index
      %c0_66 = arith.constant 0 : index
      %c0_67 = arith.constant 0 : index
      %105 = vector.load %arg10[%c0_65, %c0_66, %c0_67] : memref<1x32x1xf32, #tpu.memory_space<vmem>>, vector<1x32x1xf32>
      %106 = vector.shape_cast %105 : vector<1x32x1xf32> to vector<32x1xf32>
      %107 = vector.shape_cast %104 : vector<32x1xf32> to vector<1x32x1xf32>
      tpu.vector_store %arg10[%c0_65, %c0_66, %c0_67], %107 {strides = array<i32>} : memref<1x32x1xf32, #tpu.memory_space<vmem>>, vector<1x32x1xf32>,
    } else {
    }
    %c0_57 = arith.constant 0 : index
    %c0_58 = arith.constant 0 : index
    %c0_59 = arith.constant 0 : index
    %96 = vector.load %arg10[%c0_57, %c0_58, %c0_59] : memref<1x32x1xf32, #tpu.memory_space<vmem>>, vector<1x32x1xf32>
    %97 = vector.shape_cast %96 : vector<1x32x1xf32> to vector<32x1xf32>
    %cst_60 = arith.constant dense<0.000000e+00> : vector<32xf32>
    %98 = vector.multi_reduction <add>, %88, %cst_60 [1] : vector<32x128xf32> to vector<32xf32>
    %99 = vector.shape_cast %98 : vector<32xf32> to vector<32x1xf32>
    %100 = arith.addf %97, %99 : vector<32x1xf32>
    %c0_61 = arith.constant 0 : index
    %c0_62 = arith.constant 0 : index
    %c0_63 = arith.constant 0 : index
    %101 = vector.load %arg10[%c0_61, %c0_62, %c0_63] : memref<1x32x1xf32, #tpu.memory_space<vmem>>, vector<1x32x1xf32>
    %102 = vector.shape_cast %101 : vector<1x32x1xf32> to vector<32x1xf32>
    %103 = vector.shape_cast %100 : vector<32x1xf32> to vector<1x32x1xf32>
    tpu.vector_store %arg10[%c0_61, %c0_62, %c0_63], %103 {strides = array<i32>} : memref<1x32x1xf32, #tpu.memory_space<vmem>>, vector<1x32x1xf32>,
    return
  }
  func.func @transform_0(%arg0: i32, %arg1: i32) -> (i32, i32, i32) {
    %c0_i32 = arith.constant 0 : i32
    %c0_i32_0 = arith.constant 0 : i32
    return %arg0, %c0_i32, %arg1 : i32, i32, i32
  }
  func.func @transform_1(%arg0: i32, %arg1: i32) -> (i32, i32, i32, i32) {
    %c0_i32 = arith.constant 0 : i32
    %c0_i32_0 = arith.constant 0 : i32
    %c0_i32_1 = arith.constant 0 : i32
    return %arg0, %arg1, %c0_i32, %c0_i32_0 : i32, i32, i32, i32
  }
  func.func @transform_2(%arg0: i32, %arg1: i32) -> (i32, i32, i32, i32) {
    %c0_i32 = arith.constant 0 : i32
    %c0_i32_0 = arith.constant 0 : i32
    %c0_i32_1 = arith.constant 0 : i32
    return %arg0, %arg1, %c0_i32, %c0_i32_0 : i32, i32, i32, i32
  }
  func.func @transform_3(%arg0: i32, %arg1: i32) -> (i32, i32, i32) {
    %c0_i32 = arith.constant 0 : i32
    %c0_i32_0 = arith.constant 0 : i32
    %c0_i32_1 = arith.constant 0 : i32
    %c0_i32_2 = arith.constant 0 : i32
    return %c0_i32, %c0_i32_0, %c0_i32_1 : i32, i32, i32
  }
  func.func @transform_4(%arg0: i32, %arg1: i32) -> (i32, i32) {
    %c0_i32 = arith.constant 0 : i32
    %c0_i32_0 = arith.constant 0 : i32
    %c0_i32_1 = arith.constant 0 : i32
    return %c0_i32, %c0_i32_0 : i32, i32
  }
  func.func @transform_5(%arg0: i32, %arg1: i32) -> (i32, i32) {
    %c0_i32 = arith.constant 0 : i32
    %c0_i32_0 = arith.constant 0 : i32
    %c0_i32_1 = arith.constant 0 : i32
    return %c0_i32, %c0_i32_0 : i32, i32
  }
  func.func @transform_6(%arg0: i32, %arg1: i32) -> (i32, i32) {
    %c0_i32 = arith.constant 0 : i32
    %c0_i32_0 = arith.constant 0 : i32
    %c0_i32_1 = arith.constant 0 : i32
    return %c0_i32, %c0_i32_0 : i32, i32
  }
  func.func @transform_7(%arg0: i32, %arg1: i32) -> (i32, i32, i32) {
    %c0_i32 = arith.constant 0 : i32
    %c0_i32_0 = arith.constant 0 : i32
    return %arg0, %c0_i32, %arg1 : i32, i32, i32
  }
  func.func @transform_8(%arg0: i32, %arg1: i32) -> (i32, i32, i32) {
    %c0_i32 = arith.constant 0 : i32
    %c0_i32_0 = arith.constant 0 : i32
    %c0_i32_1 = arith.constant 0 : i32
    return %arg0, %c0_i32, %c0_i32_0 : i32, i32, i32
  }
}

module attributes {stable_mosaic.version = 11 : i64} {
  func.func @_se_scale_conv2_kernel(%arg0: i32, %arg1: i32, %arg2: memref<1x32x128xbf16, #tpu.memory_space<vmem>>, %arg3: memref<1x32x1xf32, #tpu.memory_space<vmem>>, %arg4: memref<1x1x32xf32, #tpu.memory_space<vmem>>, %arg5: memref<8x32xbf16, #tpu.memory_space<vmem>>, %arg6: memref<8x1xf32, #tpu.memory_space<vmem>>, %arg7: memref<1x32x128xbf16, #tpu.memory_space<vmem>>, %arg8: memref<1x8x128xf32, #tpu.memory_space<vmem>>) attributes {dimension_semantics = [#tpu.dimension_semantics<parallel>, #tpu.dimension_semantics<parallel>], iteration_bounds = array<i64: 2, 2>, scalar_prefetch = 0 : i64, scratch_operands = 0 : i64, tpu.core_type = #tpu.core_type<tc>, window_params = [{transform_indices = @transform_0, window_bounds = array<i64: 1, 32, 128>}, {transform_indices = @transform_1, window_bounds = array<i64: 1, 32, 1>}, {transform_indices = @transform_2, window_bounds = array<i64: 1, 1, 32>}, {pipeline_mode = #tpu.pipeline_mode<synchronous>, transform_indices = @transform_3, window_bounds = array<i64: 8, 32>}, {pipeline_mode = #tpu.pipeline_mode<synchronous>, transform_indices = @transform_4, window_bounds = array<i64: 8, 1>}, {transform_indices = @transform_5, window_bounds = array<i64: 1, 32, 128>}, {transform_indices = @transform_6, window_bounds = array<i64: 1, 8, 128>}]} {
    %c0 = arith.constant 0 : index
    %c0_0 = arith.constant 0 : index
    %c0_1 = arith.constant 0 : index
    %0 = vector.load %arg2[%c0, %c0_0, %c0_1] : memref<1x32x128xbf16, #tpu.memory_space<vmem>>, vector<1x32x128xbf16>
    %1 = vector.shape_cast %0 : vector<1x32x128xbf16> to vector<32x128xbf16>
    %c0_2 = arith.constant 0 : index
    %c0_3 = arith.constant 0 : index
    %c0_4 = arith.constant 0 : index
    %2 = vector.load %arg3[%c0_2, %c0_3, %c0_4] : memref<1x32x1xf32, #tpu.memory_space<vmem>>, vector<1x32x1xf32>
    %3 = vector.shape_cast %2 : vector<1x32x1xf32> to vector<32x1xf32>
    %4 = arith.extf %1 : vector<32x128xbf16> to vector<32x128xf32>
    %5 = vector.broadcast %3 : vector<32x1xf32> to vector<32x128xf32>
    %6 = arith.mulf %4, %5 : vector<32x128xf32>
    %7 = arith.truncf %6 : vector<32x128xf32> to vector<32x128xbf16>
    %c0_5 = arith.constant 0 : index
    %c0_6 = arith.constant 0 : index
    %c0_7 = arith.constant 0 : index
    %8 = vector.load %arg7[%c0_5, %c0_6, %c0_7] : memref<1x32x128xbf16, #tpu.memory_space<vmem>>, vector<1x32x128xbf16>
    %9 = vector.shape_cast %8 : vector<1x32x128xbf16> to vector<32x128xbf16>
    %10 = vector.shape_cast %7 : vector<32x128xbf16> to vector<1x32x128xbf16>
    tpu.vector_store %arg7[%c0_5, %c0_6, %c0_7], %10 {strides = array<i32>} : memref<1x32x128xbf16, #tpu.memory_space<vmem>>, vector<1x32x128xbf16>,
    %c0_8 = arith.constant 0 : index
    %c0_9 = arith.constant 0 : index
    %11 = vector.load %arg5[%c0_8, %c0_9] : memref<8x32xbf16, #tpu.memory_space<vmem>>, vector<8x32xbf16>
    %12 = arith.extf %11 : vector<8x32xbf16> to vector<8x32xf32>
    %c0_10 = arith.constant 0 : index
    %c0_11 = arith.constant 0 : index
    %c0_12 = arith.constant 0 : index
    %13 = vector.load %arg4[%c0_10, %c0_11, %c0_12] : memref<1x1x32xf32, #tpu.memory_space<vmem>>, vector<1x1x32xf32>
    %14 = vector.shape_cast %13 : vector<1x1x32xf32> to vector<1x32xf32>
    %15 = vector.broadcast %14 : vector<1x32xf32> to vector<8x32xf32>
    %16 = arith.mulf %12, %15 : vector<8x32xf32>
    %17 = arith.truncf %16 : vector<8x32xf32> to vector<8x32xbf16>
    %cst = arith.constant dense<0.000000e+00> : vector<8x128xf32>
    %18 = tpu.matmul %17, %1, %cst {dimension_numbers = #tpu.dot_dimension_numbers<[1], [0], [0], [1], [0, 0, 1, 1], [], []>} : vector<8x32xbf16>, vector<32x128xbf16>, vector<8x128xf32> -> vector<8x128xf32>
    %c0_13 = arith.constant 0 : index
    %c0_14 = arith.constant 0 : index
    %19 = vector.load %arg6[%c0_13, %c0_14] : memref<8x1xf32, #tpu.memory_space<vmem>>, vector<8x1xf32>
    %20 = vector.broadcast %19 : vector<8x1xf32> to vector<8x128xf32>
    %21 = arith.addf %18, %20 : vector<8x128xf32>
    %c0_15 = arith.constant 0 : index
    %c0_16 = arith.constant 0 : index
    %c0_17 = arith.constant 0 : index
    %22 = vector.load %arg8[%c0_15, %c0_16, %c0_17] : memref<1x8x128xf32, #tpu.memory_space<vmem>>, vector<1x8x128xf32>
    %23 = vector.shape_cast %22 : vector<1x8x128xf32> to vector<8x128xf32>
    %24 = vector.shape_cast %21 : vector<8x128xf32> to vector<1x8x128xf32>
    tpu.vector_store %arg8[%c0_15, %c0_16, %c0_17], %24 {strides = array<i32>} : memref<1x8x128xf32, #tpu.memory_space<vmem>>, vector<1x8x128xf32>,
    return
  }
  func.func @transform_0(%arg0: i32, %arg1: i32) -> (i32, i32, i32) {
    %c0_i32 = arith.constant 0 : i32
    %c0_i32_0 = arith.constant 0 : i32
    return %arg0, %c0_i32, %arg1 : i32, i32, i32
  }
  func.func @transform_1(%arg0: i32, %arg1: i32) -> (i32, i32, i32) {
    %c0_i32 = arith.constant 0 : i32
    %c0_i32_0 = arith.constant 0 : i32
    %c0_i32_1 = arith.constant 0 : i32
    return %arg0, %c0_i32, %c0_i32_0 : i32, i32, i32
  }
  func.func @transform_2(%arg0: i32, %arg1: i32) -> (i32, i32, i32) {
    %c0_i32 = arith.constant 0 : i32
    %c0_i32_0 = arith.constant 0 : i32
    %c0_i32_1 = arith.constant 0 : i32
    return %arg0, %c0_i32, %c0_i32_0 : i32, i32, i32
  }
  func.func @transform_3(%arg0: i32, %arg1: i32) -> (i32, i32) {
    %c0_i32 = arith.constant 0 : i32
    %c0_i32_0 = arith.constant 0 : i32
    %c0_i32_1 = arith.constant 0 : i32
    return %c0_i32, %c0_i32_0 : i32, i32
  }
  func.func @transform_4(%arg0: i32, %arg1: i32) -> (i32, i32) {
    %c0_i32 = arith.constant 0 : i32
    %c0_i32_0 = arith.constant 0 : i32
    %c0_i32_1 = arith.constant 0 : i32
    return %c0_i32, %c0_i32_0 : i32, i32
  }
  func.func @transform_5(%arg0: i32, %arg1: i32) -> (i32, i32, i32) {
    %c0_i32 = arith.constant 0 : i32
    %c0_i32_0 = arith.constant 0 : i32
    return %arg0, %c0_i32, %arg1 : i32, i32, i32
  }
  func.func @transform_6(%arg0: i32, %arg1: i32) -> (i32, i32, i32) {
    %c0_i32 = arith.constant 0 : i32
    %c0_i32_0 = arith.constant 0 : i32
    return %arg0, %c0_i32, %arg1 : i32, i32, i32
  }
}

</mosaic_0001>

<llo_original>
// kernel: alpha_hb_decoder_forward.3
$region0: #{alpha_hb_decoder_forward.3}
  #allocation0 [shape = 'u32[]', space=smem, size = 0x4, offset = 0x4, fixed_abs, tag = 'smem constant byte address 0x4 - core index']
  #allocation1 [shape = 'u32[72,128]{1,0:T(1,128)}', space=vmem, size = 0x9000, scoped, tag = 'internal scratch']
  %s0 = inlined_call_operand.vmem [shape: bf16[2,32,256], index: 0, kind: input, shape index: {}]
  %s1 = inlined_call_operand.vmem [shape: f32[2,32,1], index: 1, kind: input, shape index: {}]
  %s2 = inlined_call_operand.vmem [shape: f32[2,1,32], index: 2, kind: input, shape index: {}]
  %s3 = inlined_call_operand.vmem [shape: bf16[8,32], index: 3, kind: input, shape index: {}]
  %s4 = inlined_call_operand.vmem [shape: f32[8,1], index: 4, kind: input, shape index: {}]
  %s5 = inlined_call_operand.vmem [shape: bf16[2,32,256], index: 5, kind: output, shape index: {0}]
  %s6 = inlined_call_operand.vmem [shape: f32[2,8,256], index: 6, kind: output, shape index: {1}]
  %7 = xla_tuple %s5, %s6
  %s8 = sld [smem:[#allocation0]]
  $region139: #{alpha_hb_decoder_forward.3} parent=0
    _
  %s10 = ssub.s32 1, %s8
  %s11 = scalar_select 0, %s10, %s8
  $region1: #{alpha_hb_decoder_forward.3} parent=0
    #allocation2 [shape = 'u8[16384]{0}', space=vmem, size = 0x4000, scoped, tag = 'input window, operand 0']
    #allocation3 [shape = 'u8[16384]{0}', space=vmem, size = 0x4000, scoped, tag = 'output window, operand 0']
    loop: start=0, step=1, limit=6
    $region2: #{alpha_hb_decoder_forward.3} parent=1 // loop_pre_header
      _
    $region3: #{alpha_hb_decoder_forward.3} parent=1 // loop_header
      %s13 = sphi 0, %s17
      %p14 = scmp.ge.s32.totalorder %s13, 6
      %s20 = sphi 0, %s32
      %s21 = sphi 0, %s28
      %s22 = sphi 0, %s20
      %s23 = sphi 0, %s21
      %s24 = sphi 0, %s22
      %s25 = sphi 0, %s23
      %s37 = sphi 0, %s39
      %s40 = sphi 0, %s37
      %s41 = sphi 0, %s40
      %s57 = sphi 0, %s41
      %s63 = sphi 0, %s65
      %s66 = sphi 0, %s63
      %s67 = sphi 0, %s66
      %s83 = sphi 0, %s67
      %s89 = sphi 0, %s91
      %s92 = sphi 0, %s89
      %s93 = sphi 0, %s92
      %s109 = sphi 0, %s93
      %s113 = sphi 0, %s113
      %s115 = sphi 0, %s113
      %s116 = sphi 0, %s115
      %s130 = sphi 0, %s116
      %s134 = sphi 0, %s134
      %s136 = sphi 0, %s134
      %s137 = sphi 0, %s136
      %s151 = sphi 0, %s137
      %s159 = sphi 0, %s161
      %s162 = sphi 0, %s159
      %s163 = sphi 0, %s162
      %s179 = sphi 0, %s163
      %s187 = sphi 0, %s189
      %s190 = sphi 0, %s187
      %s191 = sphi 0, %s190
      %s207 = sphi 0, %s191
    $region4: #{alpha_hb_decoder_forward.3} parent=1 // loop_header_branch
      %16 = sbr.rel (%p14) target = $region8
    $region5: #{alpha_hb_decoder_forward.3} parent=1 // loop_body
      %s18 = ssub.s32 %s13, 1
      %s19 = ssub.s32 %s13, 2
      %s26 = sadd.s32 1, %s21
      %p27 = scmp.ge.s32.totalorder %s26, 2
      %s28 = scalar_select %p27, 0, %s26
      %s29 = sadd.s32 1, %s20
      %s30 = scalar_select %p27, %s29, %s20
      %p31 = scmp.ge.s32.totalorder %s30, 2
      %s32 = scalar_select %p31, 0, %s30
      %s33 = ssub.s32 %s20, %s32
      %s34 = ssub.s32 %s21, %s28
      %s35 = sor.u32 %s33, %s34
      %p36 = scmp.eq.s32.totalorder %s35, 0
      %s38 = sadd.s32 %s37, 1
      %s39 = scalar_select %p36, %s37, %s38
      %p42 = pneg %p36
      %p43 = scmp.eq.s32.totalorder %s13, 3
      %p44 = por %p42, %p43
      %p45 = scmp.ne.s32.totalorder %s37, %s40
      %p46 = scmp.eq.s32.totalorder %s13, 0
      %p47 = por %p45, %p46
      %p48 = scmp.ne.s32.totalorder %s37, %s40
      %p49 = scmp.eq.s32.totalorder %s18, 3
      %p50 = por %p48, %p49
      %p51 = scmp.ne.s32.totalorder %s40, %s41
      %p52 = scmp.eq.s32.totalorder %s18, 0
      %p53 = por %p51, %p52
      %p54 = scmp.ne.s32.totalorder %s40, %s41
      %p55 = scmp.eq.s32.totalorder %s19, 3
      %p56 = por %p54, %p55
      %p58 = scmp.ne.s32.totalorder %s41, %s57
      %p59 = scmp.eq.s32.totalorder %s19, 0
      %p60 = por %p58, %p59
      %s61 = ssub.s32 %s20, %s32
      %p62 = scmp.eq.s32.totalorder %s61, 0
      %s64 = sadd.s32 %s63, 1
      %s65 = scalar_select %p62, %s63, %s64
      %p68 = pneg %p62
      %p69 = scmp.eq.s32.totalorder %s13, 3
      %p70 = por %p68, %p69
      %p71 = scmp.ne.s32.totalorder %s63, %s66
      %p72 = scmp.eq.s32.totalorder %s13, 0
      %p73 = por %p71, %p72
      %p74 = scmp.ne.s32.totalorder %s63, %s66
      %p75 = scmp.eq.s32.totalorder %s18, 3
      %p76 = por %p74, %p75
      %p77 = scmp.ne.s32.totalorder %s66, %s67
      %p78 = scmp.eq.s32.totalorder %s18, 0
      %p79 = por %p77, %p78
      %p80 = scmp.ne.s32.totalorder %s66, %s67
      %p81 = scmp.eq.s32.totalorder %s19, 3
      %p82 = por %p80, %p81
      %p84 = scmp.ne.s32.totalorder %s67, %s83
      %p85 = scmp.eq.s32.totalorder %s19, 0
      %p86 = por %p84, %p85
      %s87 = ssub.s32 %s20, %s32
      %p88 = scmp.eq.s32.totalorder %s87, 0
      %s90 = sadd.s32 %s89, 1
      %s91 = scalar_select %p88, %s89, %s90
      %p94 = pneg %p88
      %p95 = scmp.eq.s32.totalorder %s13, 3
      %p96 = por %p94, %p95
      %p97 = scmp.ne.s32.totalorder %s89, %s92
      %p98 = scmp.eq.s32.totalorder %s13, 0
      %p99 = por %p97, %p98
      %p100 = scmp.ne.s32.totalorder %s89, %s92
      %p101 = scmp.eq.s32.totalorder %s18, 3
      %p102 = por %p100, %p101
      %p103 = scmp.ne.s32.totalorder %s92, %s93
      %p104 = scmp.eq.s32.totalorder %s18, 0
      %p105 = por %p103, %p104
      %p106 = scmp.ne.s32.totalorder %s92, %s93
      %p107 = scmp.eq.s32.totalorder %s19, 3
      %p108 = por %p106, %p107
      %p110 = scmp.ne.s32.totalorder %s93, %s109
      %p111 = scmp.eq.s32.totalorder %s19, 0
      %p112 = por %p110, %p111
      %s114 = sadd.s32 %s113, 1
      %p117 = scmp.eq.s32.totalorder %s13, 3
      %p118 = scmp.ne.s32.totalorder %s113, %s115
      %p119 = scmp.eq.s32.totalorder %s13, 0
      %p120 = por %p118, %p119
      %p121 = scmp.ne.s32.totalorder %s113, %s115
      %p122 = scmp.eq.s32.totalorder %s18, 3
      %p123 = por %p121, %p122
      %p124 = scmp.ne.s32.totalorder %s115, %s116
      %p125 = scmp.eq.s32.totalorder %s18, 0
      %p126 = por %p124, %p125
      %p127 = scmp.ne.s32.totalorder %s115, %s116
      %p128 = scmp.eq.s32.totalorder %s19, 3
      %p129 = por %p127, %p128
      %p131 = scmp.ne.s32.totalorder %s116, %s130
      %p132 = scmp.eq.s32.totalorder %s19, 0
      %p133 = por %p131, %p132
      %s135 = sadd.s32 %s134, 1
      %p138 = scmp.eq.s32.totalorder %s13, 3
      %p139 = scmp.ne.s32.totalorder %s134, %s136
      %p140 = scmp.eq.s32.totalorder %s13, 0
      %p141 = por %p139, %p140
      %p142 = scmp.ne.s32.totalorder %s134, %s136
      %p143 = scmp.eq.s32.totalorder %s18, 3
      %p144 = por %p142, %p143
      %p145 = scmp.ne.s32.totalorder %s136, %s137
      %p146 = scmp.eq.s32.totalorder %s18, 0
      %p147 = por %p145, %p146
      %p148 = scmp.ne.s32.totalorder %s136, %s137
      %p149 = scmp.eq.s32.totalorder %s19, 3
      %p150 = por %p148, %p149
      %p152 = scmp.ne.s32.totalorder %s137, %s151
      %p153 = scmp.eq.s32.totalorder %s19, 0
      %p154 = por %p152, %p153
      %s155 = ssub.s32 %s20, %s32
      %s156 = ssub.s32 %s21, %s28
      %s157 = sor.u32 %s155, %s156
      %p158 = scmp.eq.s32.totalorder %s157, 0
      %s160 = sadd.s32 %s159, 1
      %s161 = scalar_select %p158, %s159, %s160
      %p164 = pneg %p158
      %p165 = scmp.eq.s32.totalorder %s13, 3
      %p166 = por %p164, %p165
      %p167 = scmp.ne.s32.totalorder %s159, %s162
      %p168 = scmp.eq.s32.totalorder %s13, 0
      %p169 = por %p167, %p168
      %p170 = scmp.ne.s32.totalorder %s159, %s162
      %p171 = scmp.eq.s32.totalorder %s18, 3
      %p172 = por %p170, %p171
      %p173 = scmp.ne.s32.totalorder %s162, %s163
      %p174 = scmp.eq.s32.totalorder %s18, 0
      %p175 = por %p173, %p174
      %p176 = scmp.ne.s32.totalorder %s162, %s163
      %p177 = scmp.eq.s32.totalorder %s19, 3
      %p178 = por %p176, %p177
      %p180 = scmp.ne.s32.totalorder %s163, %s179
      %p181 = scmp.eq.s32.totalorder %s19, 0
      %p182 = por %p180, %p181
      %s183 = ssub.s32 %s20, %s32
      %s184 = ssub.s32 %s21, %s28
      %s185 = sor.u32 %s183, %s184
      %p186 = scmp.eq.s32.totalorder %s185, 0
      %s188 = sadd.s32 %s187, 1
      %s189 = scalar_select %p186, %s187, %s188
      %p192 = pneg %p186
      %p193 = scmp.eq.s32.totalorder %s13, 3
      %p194 = por %p192, %p193
      %p195 = scmp.ne.s32.totalorder %s187, %s190
      %p196 = scmp.eq.s32.totalorder %s13, 0
      %p197 = por %p195, %p196
      %p198 = scmp.ne.s32.totalorder %s187, %s190
      %p199 = scmp.eq.s32.totalorder %s18, 3
      %p200 = por %p198, %p199
      %p201 = scmp.ne.s32.totalorder %s190, %s191
      %p202 = scmp.eq.s32.totalorder %s18, 0
      %p203 = por %p201, %p202
      %p204 = scmp.ne.s32.totalorder %s190, %s191
      %p205 = scmp.eq.s32.totalorder %s19, 3
      %p206 = por %p204, %p205
      %p208 = scmp.ne.s32.totalorder %s191, %s207
      %p209 = scmp.eq.s32.totalorder %s19, 0
      %p210 = por %p208, %p209
      %p211 = scmp.le.s32.totalorder 1, %s13
      %p212 = scmp.lt.s32.totalorder %s13, 5
      %p213 = pnand %p211, %p212
      %p214 = pneg %p213
      // Predicated region
      $region9: #{alpha_hb_decoder_forward.3} parent=5 // pred_check
        _
      $region10: #{alpha_hb_decoder_forward.3} parent=5 // pred_check_branch
        %216 = sbr.rel (%p213) target = $region12
      $region11: #{alpha_hb_decoder_forward.3} parent=5 // pred_region
        %s217 = ssub.s32 %s13, 1
        // Predicated region
        $region13: #{alpha_hb_decoder_forward.3} parent=11 // pred_check
          %p218 = pneg %p126
        $region14: #{alpha_hb_decoder_forward.3} parent=11 // pred_check_branch
          %220 = sbr.rel (%p218) target = $region16
        $region15: #{alpha_hb_decoder_forward.3} parent=11 // pred_region
          _
        $region16: #{alpha_hb_decoder_forward.3} parent=11 // pred_fallthru
          _
        // Predicated region
        $region17: #{alpha_hb_decoder_forward.3} parent=11 // pred_check
          %p221 = pneg %p147
        $region18: #{alpha_hb_decoder_forward.3} parent=11 // pred_check_branch
          %223 = sbr.rel (%p221) target = $region20
        $region19: #{alpha_hb_decoder_forward.3} parent=11 // pred_region
          _
        $region20: #{alpha_hb_decoder_forward.3} parent=11 // pred_fallthru
          _
      $region12: #{alpha_hb_decoder_forward.3} parent=5 // pred_fallthru
        _
      %p224 = scmp.lt.s32.totalorder %s13, 4
      // Predicated region
      $region21: #{alpha_hb_decoder_forward.3} parent=5 // pred_check
        %p225 = pneg %p224
      $region22: #{alpha_hb_decoder_forward.3} parent=5 // pred_check_branch
        %227 = sbr.rel (%p225) target = $region24
      $region23: #{alpha_hb_decoder_forward.3} parent=5 // pred_region
        // Predicated region
        $region25: #{alpha_hb_decoder_forward.3} parent=23 // pred_check
          %p228 = pneg %p47
        $region26: #{alpha_hb_decoder_forward.3} parent=23 // pred_check_branch
          %230 = sbr.rel (%p228) target = $region28
        $region27: #{alpha_hb_decoder_forward.3} parent=23 // pred_region
          %s231 = sand.u32 %s37, 1
          %s232 = sand.u32 %s37, 1
          %s233 = smul.addr %s232, 16
          %s234 = scalar_lea.vmem [#allocation2], %s233
          %s235 = smul.addr %s20, 8
          %s236 = sadd.s32 %s21, %s235
          %s237 = smul.addr %s236, 4
          %s238 = scalar_lea.vmem %s0, %s237
          // Predicated region
          $region29: #{alpha_hb_decoder_forward.3} parent=27 // pred_check
            _
          $region30: #{alpha_hb_decoder_forward.3} parent=27 // pred_check_branch
            %240 = sbr.rel (0) target = $region32
          $region31: #{alpha_hb_decoder_forward.3} parent=27 // pred_region
            // Predicated region
            $region33: #{alpha_hb_decoder_forward.3} parent=31 // pred_check
              _
            $region34: #{alpha_hb_decoder_forward.3} parent=31 // pred_check_branch
              %242 = sbr.rel target = $region36
            $region35: #{alpha_hb_decoder_forward.3} parent=31 // pred_region
              // Predicated region
              $region48: #{alpha_hb_decoder_forward.3} parent=35 // pred_check
                _
              $region49: #{alpha_hb_decoder_forward.3} parent=35 // pred_check_branch
                %264 = sbr.rel (0) target = $region51
              $region50: #{alpha_hb_decoder_forward.3} parent=35 // pred_region
                loop: start=0, step=1, limit=1
                $region52: #{alpha_hb_decoder_forward.3} parent=50 // loop_pre_header
                  _
                $region53: #{alpha_hb_decoder_forward.3} parent=50 // loop_header
                  %s266 = sphi 0, %s270
                  %p267 = scmp.ge.s32.totalorder %s266, 1
                  %s271 = sphi %s238, %s238
                  %s272 = sphi %s234, %s234
                $region54: #{alpha_hb_decoder_forward.3} parent=50 // loop_header_branch
                  %269 = sbr.rel (%p267) target = $region58
                $region55: #{alpha_hb_decoder_forward.3} parent=50 // loop_body
                  _
                $region56: #{alpha_hb_decoder_forward.3} parent=50 // loop_footer
                  %s270 = sadd.s32 1, %s266
                $region57: #{alpha_hb_decoder_forward.3} parent=50 // loop_footer_branch
                  %265 = sbr.rel target = $region53
                $region58: #{alpha_hb_decoder_forward.3} parent=50 // loop_exit
                  _
                %s274 = ssub.s32 16, 1
                loop: start=0, step=1, limit=1
                $region59: #{alpha_hb_decoder_forward.3} parent=50 // loop_pre_header
                  _
                $region60: #{alpha_hb_decoder_forward.3} parent=50 // loop_header
                  %s276 = sphi 0, %s280
                  %p277 = scmp.ge.s32.totalorder %s276, 1
                  %s281 = sphi %s238, %s238
                  %s282 = sphi %s234, %s234
                $region61: #{alpha_hb_decoder_forward.3} parent=50 // loop_header_branch
                  %279 = sbr.rel (%p277) target = $region65
                $region62: #{alpha_hb_decoder_forward.3} parent=50 // loop_body
                  %v283 = vld [vmem:[%s281] sm:%s274]
                  %284 = vst [vmem:[%s282] sm:%s274] %v283
                  %v285 = vld [vmem:[%s281 + $0x8] sm:%s274]
                  %286 = vst [vmem:[%s282 + $0x4] sm:%s274] %v285
                  %v287 = vld [vmem:[%s281 + $0x10] sm:%s274]
                  %288 = vst [vmem:[%s282 + $0x8] sm:%s274] %v287
                  %v289 = vld [vmem:[%s281 + $0x18] sm:%s274]
                  %290 = vst [vmem:[%s282 + $0xc] sm:%s274] %v289
                $region63: #{alpha_hb_decoder_forward.3} parent=50 // loop_footer
                  %s280 = sadd.s32 1, %s276
                $region64: #{alpha_hb_decoder_forward.3} parent=50 // loop_footer_branch
                  %275 = sbr.rel target = $region60
                $region65: #{alpha_hb_decoder_forward.3} parent=50 // loop_exit
                  _
              $region51: #{alpha_hb_decoder_forward.3} parent=35 // pred_fallthru
                _
            $region36: #{alpha_hb_decoder_forward.3} parent=31 // pred_fallthru
              _
            // Predicated region
            $region37: #{alpha_hb_decoder_forward.3} parent=31 // pred_check
              _
            $region38: #{alpha_hb_decoder_forward.3} parent=31 // pred_check_branch
              %244 = sbr.rel (0) target = $region40
            $region39: #{alpha_hb_decoder_forward.3} parent=31 // pred_region
              %s246 = ssub.s32 16, 1
              loop: start=0, step=1, limit=1
              $region41: #{alpha_hb_decoder_forward.3} parent=39 // loop_pre_header
                _
              $region42: #{alpha_hb_decoder_forward.3} parent=39 // loop_header
                %s248 = sphi 0, %s252
                %p249 = scmp.ge.s32.totalorder %s248, 1
                %s253 = sphi %s238, %s238
                %s254 = sphi %s234, %s234
              $region43: #{alpha_hb_decoder_forward.3} parent=39 // loop_header_branch
                %251 = sbr.rel (%p249) target = $region47
              $region44: #{alpha_hb_decoder_forward.3} parent=39 // loop_body
                %v255 = vld [vmem:[%s253] sm:%s246]
                %256 = vst [vmem:[%s254] sm:%s246] %v255
                %v257 = vld [vmem:[%s253 + $0x8] sm:%s246]
                %258 = vst [vmem:[%s254 + $0x4] sm:%s246] %v257
                %v259 = vld [vmem:[%s253 + $0x10] sm:%s246]
                %260 = vst [vmem:[%s254 + $0x8] sm:%s246] %v259
                %v261 = vld [vmem:[%s253 + $0x18] sm:%s246]
                %262 = vst [vmem:[%s254 + $0xc] sm:%s246] %v261
              $region45: #{alpha_hb_decoder_forward.3} parent=39 // loop_footer
                %s252 = sadd.s32 1, %s248
              $region46: #{alpha_hb_decoder_forward.3} parent=39 // loop_footer_branch
                %247 = sbr.rel target = $region42
              $region47: #{alpha_hb_decoder_forward.3} parent=39 // loop_exit
                _
            $region40: #{alpha_hb_decoder_forward.3} parent=31 // pred_fallthru
              _
          $region32: #{alpha_hb_decoder_forward.3} parent=27 // pred_fallthru
            _
          %291 = vnop
        $region28: #{alpha_hb_decoder_forward.3} parent=23 // pred_fallthru
          _
        // Predicated region
        $region66: #{alpha_hb_decoder_forward.3} parent=23 // pred_check
          %p292 = pneg %p73
        $region67: #{alpha_hb_decoder_forward.3} parent=23 // pred_check_branch
          %294 = sbr.rel (%p292) target = $region69
        $region68: #{alpha_hb_decoder_forward.3} parent=23 // pred_region
          %p295 = scmp.lt.s32.totalorder %s20, 1
          %s296 = scalar_select %p295, %s20, 1
          %s297 = smul.addr %s296, 4
          %s298 = smul.addr %s297, 8
          %s299 = scalar_lea.vmem %s1, %s298
        $region69: #{alpha_hb_decoder_forward.3} parent=23 // pred_fallthru
          _
        // Predicated region
        $region70: #{alpha_hb_decoder_forward.3} parent=23 // pred_check
          %p300 = pneg %p99
        $region71: #{alpha_hb_decoder_forward.3} parent=23 // pred_check_branch
          %302 = sbr.rel (%p300) target = $region73
        $region72: #{alpha_hb_decoder_forward.3} parent=23 // pred_region
          %p303 = scmp.lt.s32.totalorder %s20, 1
          %s304 = scalar_select %p303, %s20, 1
          %s305 = scalar_lea.vmem %s2, %s304
        $region73: #{alpha_hb_decoder_forward.3} parent=23 // pred_fallthru
          _
      $region24: #{alpha_hb_decoder_forward.3} parent=5 // pred_fallthru
        _
      %p306 = scmp.le.s32.totalorder 1, %s13
      %p307 = scmp.lt.s32.totalorder %s13, 5
      %p308 = pnand %p306, %p307
      %p309 = pneg %p308
      // Predicated region
      $region74: #{alpha_hb_decoder_forward.3} parent=5 // pred_check
        _
      $region75: #{alpha_hb_decoder_forward.3} parent=5 // pred_check_branch
        %311 = sbr.rel (%p308) target = $region77
      $region76: #{alpha_hb_decoder_forward.3} parent=5 // pred_region
        %s312 = ssub.s32 %s13, 1
        %s313 = sand.u32 %s40, 1
        %s314 = sand.u32 %s40, 1
        %s315 = smul.addr %s314, 16
        %s316 = scalar_lea.vmem [#allocation2], %s315
        // Predicated region
        $region78: #{alpha_hb_decoder_forward.3} parent=76 // pred_check
          %p317 = pneg %p53
        $region79: #{alpha_hb_decoder_forward.3} parent=76 // pred_check_branch
          %319 = sbr.rel (%p317) target = $region81
        $region80: #{alpha_hb_decoder_forward.3} parent=76 // pred_region
          _
        $region81: #{alpha_hb_decoder_forward.3} parent=76 // pred_fallthru
          _
        %s320 = sand.u32 %s40, 1
        %s321 = sand.u32 %s40, 1
        %s322 = smul.addr %s321, 16
        %s323 = scalar_lea.vmem [#allocation2], %s322
        %p324 = pneg %p53
        %p325 = pneg %p50
        %p326 = scmp.lt.s32.totalorder %s22, 1
        %s327 = scalar_select %p326, %s22, 1
        %s328 = smul.addr %s327, 4
        %s329 = smul.addr %s328, 8
        %s330 = scalar_lea.vmem %s1, %s329
        %p331 = pneg %p79
        %p332 = pneg %p76
        %p333 = scmp.lt.s32.totalorder %s22, 1
        %s334 = scalar_select %p333, %s22, 1
        %s335 = scalar_lea.vmem %s2, %s334
        %p336 = pneg %p105
        %p337 = pneg %p102
        %p338 = pneg %p126
        %p339 = pneg %p123
        %p340 = pneg %p147
        %p341 = pneg %p144
        %p342 = pneg %p175
        %p343 = pneg %p172
        %s344 = sand.u32 %s162, 1
        %s345 = sand.u32 %s162, 1
        %s346 = smul.addr %s345, 16
        %s347 = scalar_lea.vmem [#allocation3], %s346
        %p348 = pneg %p203
        %p349 = pneg %p200
        %p350 = scmp.lt.s32.totalorder %s22, 1
        %s351 = scalar_select %p350, %s22, 1
        %p352 = scmp.lt.s32.totalorder %s23, 1
        %s353 = scalar_select %p352, %s23, 1
        %s354 = smul.addr %s351, 2
        %s355 = sadd.s32 %s353, %s354
        %s356 = smul.addr %s355, 8
        %s357 = scalar_lea.vmem %s6, %s356
        %p358 = scmp.lt.s32.totalorder %s22, 1
        %s359 = scalar_select %p358, %s22, 1
        %s360 = smul.addr %s359, 4
        %s361 = smul.addr %s360, 8
        %s362 = scalar_lea.vmem %s1, %s361
        %p363 = scmp.lt.s32.totalorder %s22, 1
        %s364 = scalar_select %p363, %s22, 1
        %s365 = scalar_lea.vmem %s2, %s364
        %p366 = scmp.lt.s32.totalorder %s22, 1
        %s367 = scalar_select %p366, %s22, 1
        %p368 = scmp.lt.s32.totalorder %s23, 1
        %s369 = scalar_select %p368, %s23, 1
        %s370 = smul.addr %s367, 2
        %s371 = sadd.s32 %s369, %s370
        %s372 = smul.addr %s371, 8
        %s373 = scalar_lea.vmem %s6, %s372
        %v375 = vld [vmem:[%s316] sm:$0xf]
        %v376 = vld [vmem:[%s316 + $0x4] sm:$0xf]
        %v377 = vld [vmem:[%s316 + $0x8] sm:$0xf]
        %v378 = vld [vmem:[%s316 + $0xc] sm:$0xf]
        %v379 = vld [vmem:[%s362] sm:$0xff]
        %v380 = vld [vmem:[%s362 + $0x8] sm:$0xff]
        %v381 = vld [vmem:[%s362 + $0x10] sm:$0xff]
        %v382 = vld [vmem:[%s362 + $0x18] sm:$0xff]
        %v383 = vunpack.c.l.bf16 %v375
        %v384 = vunpack.c.l.bf16 %v376
        %v385 = vunpack.c.l.bf16 %v377
        %v386 = vunpack.c.l.bf16 %v378
        %388 = vset.pattern.permute.xlu0 0
        %389 = vperm.xlu0 %388, %v379
        %v390 = vpop.permute.xlu0 %389
        %393 = vset.pattern.permute.xlu0 0
        %394 = vperm.xlu0 %393, %v380
        %v395 = vpop.permute.xlu0 %394
        %398 = vset.pattern.permute.xlu0 0
        %399 = vperm.xlu0 %398, %v381
        %v400 = vpop.permute.xlu0 %399
        %403 = vset.pattern.permute.xlu0 0
        %404 = vperm.xlu0 %403, %v382
        %v405 = vpop.permute.xlu0 %404
        %v407 = vmul.f32 %v383, %v390
        %v408 = vmul.f32 %v384, %v395
        %v409 = vmul.f32 %v385, %v400
        %v410 = vmul.f32 %v386, %v405
        %v411 = vpack.c.bf16 %v407, %v407
        %v412 = vpack.c.bf16 %v408, %v408
        %v413 = vpack.c.bf16 %v409, %v409
        %v414 = vpack.c.bf16 %v410, %v410
        %415 = vst [vmem:[%s347] sm:$0xf] %v411
        %416 = vst [vmem:[%s347 + $0x4] sm:$0xf] %v412
        %417 = vst [vmem:[%s347 + $0x8] sm:$0xf] %v413
        %418 = vst [vmem:[%s347 + $0xc] sm:$0xf] %v414
        %v419 = vld [vmem:[%s3] sm:$0xf]
        %v420 = vunpack.c.l.bf16 %v419
        %v421 = vld [vmem:[%s365] sm:$0x1]
        %v423 = vperm.slane %v421, 0
        %v425 = vmul.f32 %v420, %v423
        %v426 = vpack.c.bf16 %v425, %v425
        %v427 = vld [vmem:[%s4] sm:$0xff]
        %429 = vset.pattern.permute.xlu0 0
        %430 = vperm.xlu0 %429, %v427
        %v431 = vpop.permute.xlu0 %430
        %v437 = vunpack.c.l.b16 %v375
        %v438 = vunpack.c.l.b16 %v376
        %v439 = vunpack.c.l.b16 %v377
        %v440 = vunpack.c.l.b16 %v378
        %v441 = vpack.c.b16 %v438, %v437
        %v442 = vpack.c.b16 %v440, %v439
        %vm445 = vcmask 261120
        %v447 = vsel %vm445, %v426, 0
        %449 = vmatpush.bf16.msra.mxu0 0
        %450 = vmatpush.bf16.msra.mxu0 0
        %451 = vmatpush.bf16.msra.mxu0 0
        %452 = vmatpush.bf16.msra.mxu0 0
        %453 = vmatpush.bf16.msra.mxu0 0
        %454 = vmatpush.bf16.msra.mxu0 0
        %455 = vmatpush.bf16.msra.mxu0 %v442
        %456 = vmatpush.bf16.msra.mxu0 %v441
        %457 = vmatmul.bf16.gmra.mxu0 %v447
        %v458 = vpop.f32.mrf.mxu0
        %v459 = vadd.f32 %v431, %v458
        %v460 = vpop.f32.mrf.mxu0
        %461 = vdwg.mxu0
        %462 = vst [vmem:[%s373] sm:$0xff] %v459
        %s463 = sand.u32 %s162, 1
        %s464 = sand.u32 %s162, 1
        %s465 = smul.addr %s464, 16
        %s466 = scalar_lea.vmem [#allocation3], %s465
        %p467 = scmp.lt.s32.totalorder %s22, 1
        %s468 = scalar_select %p467, %s22, 1
        %p469 = scmp.lt.s32.totalorder %s23, 1
        %s470 = scalar_select %p469, %s23, 1
        %s471 = smul.addr %s468, 2
        %s472 = sadd.s32 %s470, %s471
        %s473 = smul.addr %s472, 8
        %s474 = scalar_lea.vmem %s6, %s473
        // Predicated region
        $region82: #{alpha_hb_decoder_forward.3} parent=76 // pred_check
          %p475 = pneg %p172
        $region83: #{alpha_hb_decoder_forward.3} parent=76 // pred_check_branch
          %477 = sbr.rel (%p475) target = $region85
        $region84: #{alpha_hb_decoder_forward.3} parent=76 // pred_region
          %s478 = smul.addr %s22, 8
          %s479 = sadd.s32 %s23, %s478
          %s480 = smul.addr %s479, 4
          %s481 = scalar_lea.vmem %s5, %s480
          // Predicated region
          $region86: #{alpha_hb_decoder_forward.3} parent=84 // pred_check
            _
          $region87: #{alpha_hb_decoder_forward.3} parent=84 // pred_check_branch
            %483 = sbr.rel (0) target = $region89
          $region88: #{alpha_hb_decoder_forward.3} parent=84 // pred_region
            // Predicated region
            $region90: #{alpha_hb_decoder_forward.3} parent=88 // pred_check
              _
            $region91: #{alpha_hb_decoder_forward.3} parent=88 // pred_check_branch
              %485 = sbr.rel target = $region93
            $region92: #{alpha_hb_decoder_forward.3} parent=88 // pred_region
              // Predicated region
              $region105: #{alpha_hb_decoder_forward.3} parent=92 // pred_check
                _
              $region106: #{alpha_hb_decoder_forward.3} parent=92 // pred_check_branch
                %507 = sbr.rel (0) target = $region108
              $region107: #{alpha_hb_decoder_forward.3} parent=92 // pred_region
                loop: start=0, step=1, limit=1
                $region109: #{alpha_hb_decoder_forward.3} parent=107 // loop_pre_header
                  _
                $region110: #{alpha_hb_decoder_forward.3} parent=107 // loop_header
                  %s509 = sphi 0, %s513
                  %p510 = scmp.ge.s32.totalorder %s509, 1
                  %s514 = sphi %s466, %s466
                  %s515 = sphi %s481, %s481
                $region111: #{alpha_hb_decoder_forward.3} parent=107 // loop_header_branch
                  %512 = sbr.rel (%p510) target = $region115
                $region112: #{alpha_hb_decoder_forward.3} parent=107 // loop_body
                  _
                $region113: #{alpha_hb_decoder_forward.3} parent=107 // loop_footer
                  %s513 = sadd.s32 1, %s509
                $region114: #{alpha_hb_decoder_forward.3} parent=107 // loop_footer_branch
                  %508 = sbr.rel target = $region110
                $region115: #{alpha_hb_decoder_forward.3} parent=107 // loop_exit
                  _
                %s517 = ssub.s32 16, 1
                loop: start=0, step=1, limit=1
                $region116: #{alpha_hb_decoder_forward.3} parent=107 // loop_pre_header
                  _
                $region117: #{alpha_hb_decoder_forward.3} parent=107 // loop_header
                  %s519 = sphi 0, %s523
                  %p520 = scmp.ge.s32.totalorder %s519, 1
                  %s524 = sphi %s466, %s466
                  %s525 = sphi %s481, %s481
                $region118: #{alpha_hb_decoder_forward.3} parent=107 // loop_header_branch
                  %522 = sbr.rel (%p520) target = $region122
                $region119: #{alpha_hb_decoder_forward.3} parent=107 // loop_body
                  %v526 = vld [vmem:[%s524] sm:%s517]
                  %527 = vst [vmem:[%s525] sm:%s517] %v526
                  %v528 = vld [vmem:[%s524 + $0x4] sm:%s517]
                  %529 = vst [vmem:[%s525 + $0x8] sm:%s517] %v528
                  %v530 = vld [vmem:[%s524 + $0x8] sm:%s517]
                  %531 = vst [vmem:[%s525 + $0x10] sm:%s517] %v530
                  %v532 = vld [vmem:[%s524 + $0xc] sm:%s517]
                  %533 = vst [vmem:[%s525 + $0x18] sm:%s517] %v532
                $region120: #{alpha_hb_decoder_forward.3} parent=107 // loop_footer
                  %s523 = sadd.s32 1, %s519
                $region121: #{alpha_hb_decoder_forward.3} parent=107 // loop_footer_branch
                  %518 = sbr.rel target = $region117
                $region122: #{alpha_hb_decoder_forward.3} parent=107 // loop_exit
                  _
              $region108: #{alpha_hb_decoder_forward.3} parent=92 // pred_fallthru
                _
            $region93: #{alpha_hb_decoder_forward.3} parent=88 // pred_fallthru
              _
            // Predicated region
            $region94: #{alpha_hb_decoder_forward.3} parent=88 // pred_check
              _
            $region95: #{alpha_hb_decoder_forward.3} parent=88 // pred_check_branch
              %487 = sbr.rel (0) target = $region97
            $region96: #{alpha_hb_decoder_forward.3} parent=88 // pred_region
              %s489 = ssub.s32 16, 1
              loop: start=0, step=1, limit=1
              $region98: #{alpha_hb_decoder_forward.3} parent=96 // loop_pre_header
                _
              $region99: #{alpha_hb_decoder_forward.3} parent=96 // loop_header
                %s491 = sphi 0, %s495
                %p492 = scmp.ge.s32.totalorder %s491, 1
                %s496 = sphi %s466, %s466
                %s497 = sphi %s481, %s481
              $region100: #{alpha_hb_decoder_forward.3} parent=96 // loop_header_branch
                %494 = sbr.rel (%p492) target = $region104
              $region101: #{alpha_hb_decoder_forward.3} parent=96 // loop_body
                %v498 = vld [vmem:[%s496] sm:%s489]
                %499 = vst [vmem:[%s497] sm:%s489] %v498
                %v500 = vld [vmem:[%s496 + $0x4] sm:%s489]
                %501 = vst [vmem:[%s497 + $0x8] sm:%s489] %v500
                %v502 = vld [vmem:[%s496 + $0x8] sm:%s489]
                %503 = vst [vmem:[%s497 + $0x10] sm:%s489] %v502
                %v504 = vld [vmem:[%s496 + $0xc] sm:%s489]
                %505 = vst [vmem:[%s497 + $0x18] sm:%s489] %v504
              $region102: #{alpha_hb_decoder_forward.3} parent=96 // loop_footer
                %s495 = sadd.s32 1, %s491
              $region103: #{alpha_hb_decoder_forward.3} parent=96 // loop_footer_branch
                %490 = sbr.rel target = $region99
              $region104: #{alpha_hb_decoder_forward.3} parent=96 // loop_exit
                _
            $region97: #{alpha_hb_decoder_forward.3} parent=88 // pred_fallthru
              _
          $region89: #{alpha_hb_decoder_forward.3} parent=84 // pred_fallthru
            _
          %534 = vnop
        $region85: #{alpha_hb_decoder_forward.3} parent=76 // pred_fallthru
          _
        // Predicated region
        $region123: #{alpha_hb_decoder_forward.3} parent=76 // pred_check
          %p535 = pneg %p200
        $region124: #{alpha_hb_decoder_forward.3} parent=76 // pred_check_branch
          %537 = sbr.rel (%p535) target = $region126
        $region125: #{alpha_hb_decoder_forward.3} parent=76 // pred_region
          _
        $region126: #{alpha_hb_decoder_forward.3} parent=76 // pred_fallthru
          _
      $region77: #{alpha_hb_decoder_forward.3} parent=5 // pred_fallthru
        _
      %p538 = scmp.le.s32.totalorder 2, %s13
      // Predicated region
      $region127: #{alpha_hb_decoder_forward.3} parent=5 // pred_check
        %p539 = pneg %p538
      $region128: #{alpha_hb_decoder_forward.3} parent=5 // pred_check_branch
        %541 = sbr.rel (%p539) target = $region130
      $region129: #{alpha_hb_decoder_forward.3} parent=5 // pred_region
        %s542 = ssub.s32 %s13, 2
        // Predicated region
        $region131: #{alpha_hb_decoder_forward.3} parent=129 // pred_check
          %p543 = pneg %p178
        $region132: #{alpha_hb_decoder_forward.3} parent=129 // pred_check_branch
          %545 = sbr.rel (%p543) target = $region134
        $region133: #{alpha_hb_decoder_forward.3} parent=129 // pred_region
          %s546 = sand.u32 %s163, 1
          %s547 = sand.u32 %s163, 1
          %s548 = smul.addr %s547, 16
          %s549 = scalar_lea.vmem [#allocation3], %s548
        $region134: #{alpha_hb_decoder_forward.3} parent=129 // pred_fallthru
          _
        // Predicated region
        $region135: #{alpha_hb_decoder_forward.3} parent=129 // pred_check
          %p550 = pneg %p206
        $region136: #{alpha_hb_decoder_forward.3} parent=129 // pred_check_branch
          %552 = sbr.rel (%p550) target = $region138
        $region137: #{alpha_hb_decoder_forward.3} parent=129 // pred_region
          %p553 = scmp.lt.s32.totalorder %s24, 1
          %s554 = scalar_select %p553, %s24, 1
          %p555 = scmp.lt.s32.totalorder %s25, 1
          %s556 = scalar_select %p555, %s25, 1
          %s557 = smul.addr %s554, 2
          %s558 = sadd.s32 %s556, %s557
          %s559 = smul.addr %s558, 8
          %s560 = scalar_lea.vmem %s6, %s559
        $region138: #{alpha_hb_decoder_forward.3} parent=129 // pred_fallthru
          _
      $region130: #{alpha_hb_decoder_forward.3} parent=5 // pred_fallthru
        _
    $region6: #{alpha_hb_decoder_forward.3} parent=1 // loop_footer
      %s17 = sadd.s32 1, %s13
    $region7: #{alpha_hb_decoder_forward.3} parent=1 // loop_footer_branch
      %12 = sbr.rel target = $region3
    $region8: #{alpha_hb_decoder_forward.3} parent=1 // loop_exit
      _

// kernel: alpha_hb_decoder_forward.2
$region0: #{alpha_hb_decoder_forward.2}
  #allocation0 [shape = 'u32[]', space=smem, size = 0x4, offset = 0x4, fixed_abs, tag = 'smem constant byte address 0x4 - core index']
  #allocation1 [shape = 'u32[72,128]{1,0:T(1,128)}', space=vmem, size = 0x9000, scoped, tag = 'internal scratch']
  %s0 = inlined_call_operand.vmem [shape: bf16[2,64,256], index: 0, kind: input, shape index: {}]
  %s1 = inlined_call_operand.vmem [shape: bf16[2,2,64,16], index: 1, kind: input, shape index: {}]
  %s2 = inlined_call_operand.vmem [shape: bf16[2,2,64,16], index: 2, kind: input, shape index: {}]
  %s3 = inlined_call_operand.vmem [shape: bf16[9,32,64], index: 3, kind: input, shape index: {}]
  %s4 = inlined_call_operand.vmem [shape: f32[32,1], index: 4, kind: input, shape index: {}]
  %s5 = inlined_call_operand.vmem [shape: bf16[32,32], index: 5, kind: input, shape index: {}]
  %s6 = inlined_call_operand.vmem [shape: f32[32,1], index: 6, kind: input, shape index: {}]
  %s7 = inlined_call_operand.vmem [shape: bf16[2,32,256], index: 7, kind: output, shape index: {0}]
  %s8 = inlined_call_operand.vmem [shape: f32[2,32,1], index: 8, kind: output, shape index: {1}]
  %9 = xla_tuple %s7, %s8
  %s10 = sld [smem:[#allocation0]]
  $region151: #{alpha_hb_decoder_forward.2} parent=0
    _
  %s12 = ssub.s32 1, %s10
  %s13 = scalar_select 0, %s12, %s10
  $region1: #{alpha_hb_decoder_forward.2} parent=0
    #allocation2 [shape = 'u8[32768]{0}', space=vmem, size = 0x8000, scoped, tag = 'input window, operand 0']
    #allocation3 [shape = 'u8[16384]{0}', space=vmem, size = 0x4000, scoped, tag = 'output window, operand 0']
    loop: start=0, step=1, limit=6
    $region2: #{alpha_hb_decoder_forward.2} parent=1 // loop_pre_header
      _
    $region3: #{alpha_hb_decoder_forward.2} parent=1 // loop_header
      %s15 = sphi 0, %s19
      %p16 = scmp.ge.s32.totalorder %s15, 6
      %s22 = sphi 0, %s34
      %s23 = sphi 0, %s30
      %s24 = sphi 0, %s22
      %s25 = sphi 0, %s23
      %s26 = sphi 0, %s24
      %s27 = sphi 0, %s25
      %s39 = sphi 0, %s41
      %s42 = sphi 0, %s39
      %s43 = sphi 0, %s42
      %s59 = sphi 0, %s43
      %s67 = sphi 0, %s69
      %s70 = sphi 0, %s67
      %s71 = sphi 0, %s70
      %s87 = sphi 0, %s71
      %s95 = sphi 0, %s97
      %s98 = sphi 0, %s95
      %s99 = sphi 0, %s98
      %s115 = sphi 0, %s99
      %s119 = sphi 0, %s119
      %s121 = sphi 0, %s119
      %s122 = sphi 0, %s121
      %s136 = sphi 0, %s122
      %s140 = sphi 0, %s140
      %s142 = sphi 0, %s140
      %s143 = sphi 0, %s142
      %s157 = sphi 0, %s143
      %s161 = sphi 0, %s161
      %s163 = sphi 0, %s161
      %s164 = sphi 0, %s163
      %s178 = sphi 0, %s164
      %s182 = sphi 0, %s182
      %s184 = sphi 0, %s182
      %s185 = sphi 0, %s184
      %s199 = sphi 0, %s185
      %s207 = sphi 0, %s209
      %s210 = sphi 0, %s207
      %s211 = sphi 0, %s210
      %s227 = sphi 0, %s211
      %s233 = sphi 0, %s235
      %s236 = sphi 0, %s233
      %s237 = sphi 0, %s236
      %s253 = sphi 0, %s237
    $region4: #{alpha_hb_decoder_forward.2} parent=1 // loop_header_branch
      %18 = sbr.rel (%p16) target = $region8
    $region5: #{alpha_hb_decoder_forward.2} parent=1 // loop_body
      %s20 = ssub.s32 %s15, 1
      %s21 = ssub.s32 %s15, 2
      %s28 = sadd.s32 1, %s23
      %p29 = scmp.ge.s32.totalorder %s28, 2
      %s30 = scalar_select %p29, 0, %s28
      %s31 = sadd.s32 1, %s22
      %s32 = scalar_select %p29, %s31, %s22
      %p33 = scmp.ge.s32.totalorder %s32, 2
      %s34 = scalar_select %p33, 0, %s32
      %s35 = ssub.s32 %s22, %s34
      %s36 = ssub.s32 %s23, %s30
      %s37 = sor.u32 %s35, %s36
      %p38 = scmp.eq.s32.totalorder %s37, 0
      %s40 = sadd.s32 %s39, 1
      %s41 = scalar_select %p38, %s39, %s40
      %p44 = pneg %p38
      %p45 = scmp.eq.s32.totalorder %s15, 3
      %p46 = por %p44, %p45
      %p47 = scmp.ne.s32.totalorder %s39, %s42
      %p48 = scmp.eq.s32.totalorder %s15, 0
      %p49 = por %p47, %p48
      %p50 = scmp.ne.s32.totalorder %s39, %s42
      %p51 = scmp.eq.s32.totalorder %s20, 3
      %p52 = por %p50, %p51
      %p53 = scmp.ne.s32.totalorder %s42, %s43
      %p54 = scmp.eq.s32.totalorder %s20, 0
      %p55 = por %p53, %p54
      %p56 = scmp.ne.s32.totalorder %s42, %s43
      %p57 = scmp.eq.s32.totalorder %s21, 3
      %p58 = por %p56, %p57
      %p60 = scmp.ne.s32.totalorder %s43, %s59
      %p61 = scmp.eq.s32.totalorder %s21, 0
      %p62 = por %p60, %p61
      %s63 = ssub.s32 %s22, %s34
      %s64 = ssub.s32 %s23, %s30
      %s65 = sor.u32 %s63, %s64
      %p66 = scmp.eq.s32.totalorder %s65, 0
      %s68 = sadd.s32 %s67, 1
      %s69 = scalar_select %p66, %s67, %s68
      %p72 = pneg %p66
      %p73 = scmp.eq.s32.totalorder %s15, 3
      %p74 = por %p72, %p73
      %p75 = scmp.ne.s32.totalorder %s67, %s70
      %p76 = scmp.eq.s32.totalorder %s15, 0
      %p77 = por %p75, %p76
      %p78 = scmp.ne.s32.totalorder %s67, %s70
      %p79 = scmp.eq.s32.totalorder %s20, 3
      %p80 = por %p78, %p79
      %p81 = scmp.ne.s32.totalorder %s70, %s71
      %p82 = scmp.eq.s32.totalorder %s20, 0
      %p83 = por %p81, %p82
      %p84 = scmp.ne.s32.totalorder %s70, %s71
      %p85 = scmp.eq.s32.totalorder %s21, 3
      %p86 = por %p84, %p85
      %p88 = scmp.ne.s32.totalorder %s71, %s87
      %p89 = scmp.eq.s32.totalorder %s21, 0
      %p90 = por %p88, %p89
      %s91 = ssub.s32 %s22, %s34
      %s92 = ssub.s32 %s23, %s30
      %s93 = sor.u32 %s91, %s92
      %p94 = scmp.eq.s32.totalorder %s93, 0
      %s96 = sadd.s32 %s95, 1
      %s97 = scalar_select %p94, %s95, %s96
      %p100 = pneg %p94
      %p101 = scmp.eq.s32.totalorder %s15, 3
      %p102 = por %p100, %p101
      %p103 = scmp.ne.s32.totalorder %s95, %s98
      %p104 = scmp.eq.s32.totalorder %s15, 0
      %p105 = por %p103, %p104
      %p106 = scmp.ne.s32.totalorder %s95, %s98
      %p107 = scmp.eq.s32.totalorder %s20, 3
      %p108 = por %p106, %p107
      %p109 = scmp.ne.s32.totalorder %s98, %s99
      %p110 = scmp.eq.s32.totalorder %s20, 0
      %p111 = por %p109, %p110
      %p112 = scmp.ne.s32.totalorder %s98, %s99
      %p113 = scmp.eq.s32.totalorder %s21, 3
      %p114 = por %p112, %p113
      %p116 = scmp.ne.s32.totalorder %s99, %s115
      %p117 = scmp.eq.s32.totalorder %s21, 0
      %p118 = por %p116, %p117
      %s120 = sadd.s32 %s119, 1
      %p123 = scmp.eq.s32.totalorder %s15, 3
      %p124 = scmp.ne.s32.totalorder %s119, %s121
      %p125 = scmp.eq.s32.totalorder %s15, 0
      %p126 = por %p124, %p125
      %p127 = scmp.ne.s32.totalorder %s119, %s121
      %p128 = scmp.eq.s32.totalorder %s20, 3
      %p129 = por %p127, %p128
      %p130 = scmp.ne.s32.totalorder %s121, %s122
      %p131 = scmp.eq.s32.totalorder %s20, 0
      %p132 = por %p130, %p131
      %p133 = scmp.ne.s32.totalorder %s121, %s122
      %p134 = scmp.eq.s32.totalorder %s21, 3
      %p135 = por %p133, %p134
      %p137 = scmp.ne.s32.totalorder %s122, %s136
      %p138 = scmp.eq.s32.totalorder %s21, 0
      %p139 = por %p137, %p138
      %s141 = sadd.s32 %s140, 1
      %p144 = scmp.eq.s32.totalorder %s15, 3
      %p145 = scmp.ne.s32.totalorder %s140, %s142
      %p146 = scmp.eq.s32.totalorder %s15, 0
      %p147 = por %p145, %p146
      %p148 = scmp.ne.s32.totalorder %s140, %s142
      %p149 = scmp.eq.s32.totalorder %s20, 3
      %p150 = por %p148, %p149
      %p151 = scmp.ne.s32.totalorder %s142, %s143
      %p152 = scmp.eq.s32.totalorder %s20, 0
      %p153 = por %p151, %p152
      %p154 = scmp.ne.s32.totalorder %s142, %s143
      %p155 = scmp.eq.s32.totalorder %s21, 3
      %p156 = por %p154, %p155
      %p158 = scmp.ne.s32.totalorder %s143, %s157
      %p159 = scmp.eq.s32.totalorder %s21, 0
      %p160 = por %p158, %p159
      %s162 = sadd.s32 %s161, 1
      %p165 = scmp.eq.s32.totalorder %s15, 3
      %p166 = scmp.ne.s32.totalorder %s161, %s163
      %p167 = scmp.eq.s32.totalorder %s15, 0
      %p168 = por %p166, %p167
      %p169 = scmp.ne.s32.totalorder %s161, %s163
      %p170 = scmp.eq.s32.totalorder %s20, 3
      %p171 = por %p169, %p170
      %p172 = scmp.ne.s32.totalorder %s163, %s164
      %p173 = scmp.eq.s32.totalorder %s20, 0
      %p174 = por %p172, %p173
      %p175 = scmp.ne.s32.totalorder %s163, %s164
      %p176 = scmp.eq.s32.totalorder %s21, 3
      %p177 = por %p175, %p176
      %p179 = scmp.ne.s32.totalorder %s164, %s178
      %p180 = scmp.eq.s32.totalorder %s21, 0
      %p181 = por %p179, %p180
      %s183 = sadd.s32 %s182, 1
      %p186 = scmp.eq.s32.totalorder %s15, 3
      %p187 = scmp.ne.s32.totalorder %s182, %s184
      %p188 = scmp.eq.s32.totalorder %s15, 0
      %p189 = por %p187, %p188
      %p190 = scmp.ne.s32.totalorder %s182, %s184
      %p191 = scmp.eq.s32.totalorder %s20, 3
      %p192 = por %p190, %p191
      %p193 = scmp.ne.s32.totalorder %s184, %s185
      %p194 = scmp.eq.s32.totalorder %s20, 0
      %p195 = por %p193, %p194
      %p196 = scmp.ne.s32.totalorder %s184, %s185
      %p197 = scmp.eq.s32.totalorder %s21, 3
      %p198 = por %p196, %p197
      %p200 = scmp.ne.s32.totalorder %s185, %s199
      %p201 = scmp.eq.s32.totalorder %s21, 0
      %p202 = por %p200, %p201
      %s203 = ssub.s32 %s22, %s34
      %s204 = ssub.s32 %s23, %s30
      %s205 = sor.u32 %s203, %s204
      %p206 = scmp.eq.s32.totalorder %s205, 0
      %s208 = sadd.s32 %s207, 1
      %s209 = scalar_select %p206, %s207, %s208
      %p212 = pneg %p206
      %p213 = scmp.eq.s32.totalorder %s15, 3
      %p214 = por %p212, %p213
      %p215 = scmp.ne.s32.totalorder %s207, %s210
      %p216 = scmp.eq.s32.totalorder %s15, 0
      %p217 = por %p215, %p216
      %p218 = scmp.ne.s32.totalorder %s207, %s210
      %p219 = scmp.eq.s32.totalorder %s20, 3
      %p220 = por %p218, %p219
      %p221 = scmp.ne.s32.totalorder %s210, %s211
      %p222 = scmp.eq.s32.totalorder %s20, 0
      %p223 = por %p221, %p222
      %p224 = scmp.ne.s32.totalorder %s210, %s211
      %p225 = scmp.eq.s32.totalorder %s21, 3
      %p226 = por %p224, %p225
      %p228 = scmp.ne.s32.totalorder %s211, %s227
      %p229 = scmp.eq.s32.totalorder %s21, 0
      %p230 = por %p228, %p229
      %s231 = ssub.s32 %s22, %s34
      %p232 = scmp.eq.s32.totalorder %s231, 0
      %s234 = sadd.s32 %s233, 1
      %s235 = scalar_select %p232, %s233, %s234
      %p238 = pneg %p232
      %p239 = scmp.eq.s32.totalorder %s15, 3
      %p240 = por %p238, %p239
      %p241 = scmp.ne.s32.totalorder %s233, %s236
      %p242 = scmp.eq.s32.totalorder %s15, 0
      %p243 = por %p241, %p242
      %p244 = scmp.ne.s32.totalorder %s233, %s236
      %p245 = scmp.eq.s32.totalorder %s20, 3
      %p246 = por %p244, %p245
      %p247 = scmp.ne.s32.totalorder %s236, %s237
      %p248 = scmp.eq.s32.totalorder %s20, 0
      %p249 = por %p247, %p248
      %p250 = scmp.ne.s32.totalorder %s236, %s237
      %p251 = scmp.eq.s32.totalorder %s21, 3
      %p252 = por %p250, %p251
      %p254 = scmp.ne.s32.totalorder %s237, %s253
      %p255 = scmp.eq.s32.totalorder %s21, 0
      %p256 = por %p254, %p255
      %p257 = scmp.le.s32.totalorder 1, %s15
      %p258 = scmp.lt.s32.totalorder %s15, 5
      %p259 = pnand %p257, %p258
      %p260 = pneg %p259
      // Predicated region
      $region9: #{alpha_hb_decoder_forward.2} parent=5 // pred_check
        _
      $region10: #{alpha_hb_decoder_forward.2} parent=5 // pred_check_branch
        %262 = sbr.rel (%p259) target = $region12
      $region11: #{alpha_hb_decoder_forward.2} parent=5 // pred_region
        %s263 = ssub.s32 %s15, 1
        // Predicated region
        $region13: #{alpha_hb_decoder_forward.2} parent=11 // pred_check
          %p264 = pneg %p132
        $region14: #{alpha_hb_decoder_forward.2} parent=11 // pred_check_branch
          %266 = sbr.rel (%p264) target = $region16
        $region15: #{alpha_hb_decoder_forward.2} parent=11 // pred_region
          _
        $region16: #{alpha_hb_decoder_forward.2} parent=11 // pred_fallthru
          _
        // Predicated region
        $region17: #{alpha_hb_decoder_forward.2} parent=11 // pred_check
          %p267 = pneg %p153
        $region18: #{alpha_hb_decoder_forward.2} parent=11 // pred_check_branch
          %269 = sbr.rel (%p267) target = $region20
        $region19: #{alpha_hb_decoder_forward.2} parent=11 // pred_region
          _
        $region20: #{alpha_hb_decoder_forward.2} parent=11 // pred_fallthru
          _
        // Predicated region
        $region21: #{alpha_hb_decoder_forward.2} parent=11 // pred_check
          %p270 = pneg %p174
        $region22: #{alpha_hb_decoder_forward.2} parent=11 // pred_check_branch
          %272 = sbr.rel (%p270) target = $region24
        $region23: #{alpha_hb_decoder_forward.2} parent=11 // pred_region
          _
        $region24: #{alpha_hb_decoder_forward.2} parent=11 // pred_fallthru
          _
        // Predicated region
        $region25: #{alpha_hb_decoder_forward.2} parent=11 // pred_check
          %p273 = pneg %p195
        $region26: #{alpha_hb_decoder_forward.2} parent=11 // pred_check_branch
          %275 = sbr.rel (%p273) target = $region28
        $region27: #{alpha_hb_decoder_forward.2} parent=11 // pred_region
          _
        $region28: #{alpha_hb_decoder_forward.2} parent=11 // pred_fallthru
          _
      $region12: #{alpha_hb_decoder_forward.2} parent=5 // pred_fallthru
        _
      %p276 = scmp.lt.s32.totalorder %s15, 4
      // Predicated region
      $region29: #{alpha_hb_decoder_forward.2} parent=5 // pred_check
        %p277 = pneg %p276
      $region30: #{alpha_hb_decoder_forward.2} parent=5 // pred_check_branch
        %279 = sbr.rel (%p277) target = $region32
      $region31: #{alpha_hb_decoder_forward.2} parent=5 // pred_region
        // Predicated region
        $region33: #{alpha_hb_decoder_forward.2} parent=31 // pred_check
          %p280 = pneg %p49
        $region34: #{alpha_hb_decoder_forward.2} parent=31 // pred_check_branch
          %282 = sbr.rel (%p280) target = $region36
        $region35: #{alpha_hb_decoder_forward.2} parent=31 // pred_region
          %s283 = sand.u32 %s39, 1
          %s284 = sand.u32 %s39, 1
          %s285 = smul.addr %s284, 32
          %s286 = scalar_lea.vmem [#allocation2], %s285
          %s287 = smul.addr %s22, 16
          %s288 = sadd.s32 %s23, %s287
          %s289 = smul.addr %s288, 4
          %s290 = scalar_lea.vmem %s0, %s289
          // Predicated region
          $region37: #{alpha_hb_decoder_forward.2} parent=35 // pred_check
            _
          $region38: #{alpha_hb_decoder_forward.2} parent=35 // pred_check_branch
            %292 = sbr.rel (0) target = $region40
          $region39: #{alpha_hb_decoder_forward.2} parent=35 // pred_region
            // Predicated region
            $region41: #{alpha_hb_decoder_forward.2} parent=39 // pred_check
              _
            $region42: #{alpha_hb_decoder_forward.2} parent=39 // pred_check_branch
              %294 = sbr.rel target = $region44
            $region43: #{alpha_hb_decoder_forward.2} parent=39 // pred_region
              // Predicated region
              $region56: #{alpha_hb_decoder_forward.2} parent=43 // pred_check
                _
              $region57: #{alpha_hb_decoder_forward.2} parent=43 // pred_check_branch
                %324 = sbr.rel (0) target = $region59
              $region58: #{alpha_hb_decoder_forward.2} parent=43 // pred_region
                loop: start=0, step=1, limit=1
                $region60: #{alpha_hb_decoder_forward.2} parent=58 // loop_pre_header
                  _
                $region61: #{alpha_hb_decoder_forward.2} parent=58 // loop_header
                  %s326 = sphi 0, %s330
                  %p327 = scmp.ge.s32.totalorder %s326, 1
                  %s331 = sphi %s290, %s290
                  %s332 = sphi %s286, %s286
                $region62: #{alpha_hb_decoder_forward.2} parent=58 // loop_header_branch
                  %329 = sbr.rel (%p327) target = $region66
                $region63: #{alpha_hb_decoder_forward.2} parent=58 // loop_body
                  _
                $region64: #{alpha_hb_decoder_forward.2} parent=58 // loop_footer
                  %s330 = sadd.s32 1, %s326
                $region65: #{alpha_hb_decoder_forward.2} parent=58 // loop_footer_branch
                  %325 = sbr.rel target = $region61
                $region66: #{alpha_hb_decoder_forward.2} parent=58 // loop_exit
                  _
                %s334 = ssub.s32 16, 1
                loop: start=0, step=1, limit=1
                $region67: #{alpha_hb_decoder_forward.2} parent=58 // loop_pre_header
                  _
                $region68: #{alpha_hb_decoder_forward.2} parent=58 // loop_header
                  %s336 = sphi 0, %s340
                  %p337 = scmp.ge.s32.totalorder %s336, 1
                  %s341 = sphi %s290, %s290
                  %s342 = sphi %s286, %s286
                $region69: #{alpha_hb_decoder_forward.2} parent=58 // loop_header_branch
                  %339 = sbr.rel (%p337) target = $region73
                $region70: #{alpha_hb_decoder_forward.2} parent=58 // loop_body
                  %v343 = vld [vmem:[%s341] sm:%s334]
                  %344 = vst [vmem:[%s342] sm:%s334] %v343
                  %v345 = vld [vmem:[%s341 + $0x8] sm:%s334]
                  %346 = vst [vmem:[%s342 + $0x4] sm:%s334] %v345
                  %v347 = vld [vmem:[%s341 + $0x10] sm:%s334]
                  %348 = vst [vmem:[%s342 + $0x8] sm:%s334] %v347
                  %v349 = vld [vmem:[%s341 + $0x18] sm:%s334]
                  %350 = vst [vmem:[%s342 + $0xc] sm:%s334] %v349
                  %v351 = vld [vmem:[%s341 + $0x20] sm:%s334]
                  %352 = vst [vmem:[%s342 + $0x10] sm:%s334] %v351
                  %v353 = vld [vmem:[%s341 + $0x28] sm:%s334]
                  %354 = vst [vmem:[%s342 + $0x14] sm:%s334] %v353
                  %v355 = vld [vmem:[%s341 + $0x30] sm:%s334]
                  %356 = vst [vmem:[%s342 + $0x18] sm:%s334] %v355
                  %v357 = vld [vmem:[%s341 + $0x38] sm:%s334]
                  %358 = vst [vmem:[%s342 + $0x1c] sm:%s334] %v357
                $region71: #{alpha_hb_decoder_forward.2} parent=58 // loop_footer
                  %s340 = sadd.s32 1, %s336
                $region72: #{alpha_hb_decoder_forward.2} parent=58 // loop_footer_branch
                  %335 = sbr.rel target = $region68
                $region73: #{alpha_hb_decoder_forward.2} parent=58 // loop_exit
                  _
              $region59: #{alpha_hb_decoder_forward.2} parent=43 // pred_fallthru
                _
            $region44: #{alpha_hb_decoder_forward.2} parent=39 // pred_fallthru
              _
            // Predicated region
            $region45: #{alpha_hb_decoder_forward.2} parent=39 // pred_check
              _
            $region46: #{alpha_hb_decoder_forward.2} parent=39 // pred_check_branch
              %296 = sbr.rel (0) target = $region48
            $region47: #{alpha_hb_decoder_forward.2} parent=39 // pred_region
              %s298 = ssub.s32 16, 1
              loop: start=0, step=1, limit=1
              $region49: #{alpha_hb_decoder_forward.2} parent=47 // loop_pre_header
                _
              $region50: #{alpha_hb_decoder_forward.2} parent=47 // loop_header
                %s300 = sphi 0, %s304
                %p301 = scmp.ge.s32.totalorder %s300, 1
                %s305 = sphi %s290, %s290
                %s306 = sphi %s286, %s286
              $region51: #{alpha_hb_decoder_forward.2} parent=47 // loop_header_branch
                %303 = sbr.rel (%p301) target = $region55
              $region52: #{alpha_hb_decoder_forward.2} parent=47 // loop_body
                %v307 = vld [vmem:[%s305] sm:%s298]
                %308 = vst [vmem:[%s306] sm:%s298] %v307
                %v309 = vld [vmem:[%s305 + $0x8] sm:%s298]
                %310 = vst [vmem:[%s306 + $0x4] sm:%s298] %v309
                %v311 = vld [vmem:[%s305 + $0x10] sm:%s298]
                %312 = vst [vmem:[%s306 + $0x8] sm:%s298] %v311
                %v313 = vld [vmem:[%s305 + $0x18] sm:%s298]
                %314 = vst [vmem:[%s306 + $0xc] sm:%s298] %v313
                %v315 = vld [vmem:[%s305 + $0x20] sm:%s298]
                %316 = vst [vmem:[%s306 + $0x10] sm:%s298] %v315
                %v317 = vld [vmem:[%s305 + $0x28] sm:%s298]
                %318 = vst [vmem:[%s306 + $0x14] sm:%s298] %v317
                %v319 = vld [vmem:[%s305 + $0x30] sm:%s298]
                %320 = vst [vmem:[%s306 + $0x18] sm:%s298] %v319
                %v321 = vld [vmem:[%s305 + $0x38] sm:%s298]
                %322 = vst [vmem:[%s306 + $0x1c] sm:%s298] %v321
              $region53: #{alpha_hb_decoder_forward.2} parent=47 // loop_footer
                %s304 = sadd.s32 1, %s300
              $region54: #{alpha_hb_decoder_forward.2} parent=47 // loop_footer_branch
                %299 = sbr.rel target = $region50
              $region55: #{alpha_hb_decoder_forward.2} parent=47 // loop_exit
                _
            $region48: #{alpha_hb_decoder_forward.2} parent=39 // pred_fallthru
              _
          $region40: #{alpha_hb_decoder_forward.2} parent=35 // pred_fallthru
            _
          %359 = vnop
        $region36: #{alpha_hb_decoder_forward.2} parent=31 // pred_fallthru
          _
        // Predicated region
        $region74: #{alpha_hb_decoder_forward.2} parent=31 // pred_check
          %p360 = pneg %p77
        $region75: #{alpha_hb_decoder_forward.2} parent=31 // pred_check_branch
          %362 = sbr.rel (%p360) target = $region77
        $region76: #{alpha_hb_decoder_forward.2} parent=31 // pred_region
          %p363 = scmp.lt.s32.totalorder %s22, 1
          %s364 = scalar_select %p363, %s22, 1
          %p365 = scmp.lt.s32.totalorder %s23, 1
          %s366 = scalar_select %p365, %s23, 1
          %s367 = smul.addr %s366, 8
          %s368 = smul.addr %s364, 16
          %s369 = sadd.s32 %s367, %s368
          %s370 = smul.addr %s369, 4
          %s371 = scalar_lea.vmem %s1, %s370
        $region77: #{alpha_hb_decoder_forward.2} parent=31 // pred_fallthru
          _
        // Predicated region
        $region78: #{alpha_hb_decoder_forward.2} parent=31 // pred_check
          %p372 = pneg %p105
        $region79: #{alpha_hb_decoder_forward.2} parent=31 // pred_check_branch
          %374 = sbr.rel (%p372) target = $region81
        $region80: #{alpha_hb_decoder_forward.2} parent=31 // pred_region
          %p375 = scmp.lt.s32.totalorder %s22, 1
          %s376 = scalar_select %p375, %s22, 1
          %p377 = scmp.lt.s32.totalorder %s23, 1
          %s378 = scalar_select %p377, %s23, 1
          %s379 = smul.addr %s378, 8
          %s380 = smul.addr %s376, 16
          %s381 = sadd.s32 %s379, %s380
          %s382 = smul.addr %s381, 4
          %s383 = scalar_lea.vmem %s2, %s382
        $region81: #{alpha_hb_decoder_forward.2} parent=31 // pred_fallthru
          _
      $region32: #{alpha_hb_decoder_forward.2} parent=5 // pred_fallthru
        _
      %p384 = scmp.le.s32.totalorder 1, %s15
      %p385 = scmp.lt.s32.totalorder %s15, 5
      %p386 = pnand %p384, %p385
      %p387 = pneg %p386
      // Predicated region
      $region82: #{alpha_hb_decoder_forward.2} parent=5 // pred_check
        _
      $region83: #{alpha_hb_decoder_forward.2} parent=5 // pred_check_branch
        %389 = sbr.rel (%p386) target = $region85
      $region84: #{alpha_hb_decoder_forward.2} parent=5 // pred_region
        %s390 = ssub.s32 %s15, 1
        %s391 = sand.u32 %s42, 1
        %s392 = sand.u32 %s42, 1
        %s393 = smul.addr %s392, 32
        %s394 = scalar_lea.vmem [#allocation2], %s393
        // Predicated region
        $region86: #{alpha_hb_decoder_forward.2} parent=84 // pred_check
          %p395 = pneg %p55
        $region87: #{alpha_hb_decoder_forward.2} parent=84 // pred_check_branch
          %397 = sbr.rel (%p395) target = $region89
        $region88: #{alpha_hb_decoder_forward.2} parent=84 // pred_region
          _
        $region89: #{alpha_hb_decoder_forward.2} parent=84 // pred_fallthru
          _
        %s398 = sand.u32 %s42, 1
        %s399 = sand.u32 %s42, 1
        %s400 = smul.addr %s399, 32
        %s401 = scalar_lea.vmem [#allocation2], %s400
        %p402 = pneg %p55
        %p403 = pneg %p52
        %p404 = scmp.lt.s32.totalorder %s24, 1
        %s405 = scalar_select %p404, %s24, 1
        %p406 = scmp.lt.s32.totalorder %s25, 1
        %s407 = scalar_select %p406, %s25, 1
        %s408 = smul.addr %s407, 8
        %s409 = smul.addr %s405, 16
        %s410 = sadd.s32 %s408, %s409
        %s411 = smul.addr %s410, 4
        %s412 = scalar_lea.vmem %s1, %s411
        %p413 = pneg %p83
        %p414 = pneg %p80
        %p415 = scmp.lt.s32.totalorder %s24, 1
        %s416 = scalar_select %p415, %s24, 1
        %p417 = scmp.lt.s32.totalorder %s25, 1
        %s418 = scalar_select %p417, %s25, 1
        %s419 = smul.addr %s418, 8
        %s420 = smul.addr %s416, 16
        %s421 = sadd.s32 %s419, %s420
        %s422 = smul.addr %s421, 4
        %s423 = scalar_lea.vmem %s2, %s422
        %p424 = pneg %p111
        %p425 = pneg %p108
        %p426 = pneg %p132
        %p427 = pneg %p129
        %p428 = pneg %p153
        %p429 = pneg %p150
        %p430 = pneg %p174
        %p431 = pneg %p171
        %p432 = pneg %p195
        %p433 = pneg %p192
        %p434 = pneg %p223
        %p435 = pneg %p220
        %s436 = sand.u32 %s210, 1
        %s437 = sand.u32 %s210, 1
        %s438 = smul.addr %s437, 16
        %s439 = scalar_lea.vmem [#allocation3], %s438
        %p440 = pneg %p249
        %p441 = pneg %p246
        %p442 = scmp.lt.s32.totalorder %s24, 1
        %s443 = scalar_select %p442, %s24, 1
        %s444 = smul.addr %s443, 4
        %s445 = smul.addr %s444, 8
        %s446 = scalar_lea.vmem %s8, %s445
        %p447 = scmp.lt.s32.totalorder %s24, 1
        %s448 = scalar_select %p447, %s24, 1
        %p449 = scmp.lt.s32.totalorder %s25, 1
        %s450 = scalar_select %p449, %s25, 1
        %s451 = smul.addr %s450, 8
        %s452 = smul.addr %s448, 16
        %s453 = sadd.s32 %s451, %s452
        %s454 = smul.addr %s453, 4
        %s455 = scalar_lea.vmem %s1, %s454
        %p456 = scmp.lt.s32.totalorder %s24, 1
        %s457 = scalar_select %p456, %s24, 1
        %p458 = scmp.lt.s32.totalorder %s25, 1
        %s459 = scalar_select %p458, %s25, 1
        %s460 = smul.addr %s459, 8
        %s461 = smul.addr %s457, 16
        %s462 = sadd.s32 %s460, %s461
        %s463 = smul.addr %s462, 4
        %s464 = scalar_lea.vmem %s2, %s463
        %p465 = scmp.lt.s32.totalorder %s24, 1
        %s466 = scalar_select %p465, %s24, 1
        %s467 = smul.addr %s466, 4
        %s468 = smul.addr %s467, 8
        %s469 = scalar_lea.vmem %s8, %s468
        %v471 = vld [vmem:[%s394] sm:$0xf]
        %v472 = vld [vmem:[%s394 + $0x4] sm:$0xf]
        %v473 = vld [vmem:[%s394 + $0x8] sm:$0xf]
        %v474 = vld [vmem:[%s394 + $0xc] sm:$0xf]
        %v475 = vld [vmem:[%s394 + $0x10] sm:$0xf]
        %v476 = vld [vmem:[%s394 + $0x14] sm:$0xf]
        %v477 = vld [vmem:[%s394 + $0x18] sm:$0xf]
        %v478 = vld [vmem:[%s394 + $0x1c] sm:$0xf]
        %v479 = vld [vmem:[%s455] sm:$0xf]
        %v480 = vld [vmem:[%s455 + $0x4] sm:$0xf]
        %v481 = vld [vmem:[%s455 + $0x8] sm:$0xf]
        %v482 = vld [vmem:[%s455 + $0xc] sm:$0xf]
        %v483 = vld [vmem:[%s455 + $0x10] sm:$0xf]
        %v484 = vld [vmem:[%s455 + $0x14] sm:$0xf]
        %v485 = vld [vmem:[%s455 + $0x18] sm:$0xf]
        %v486 = vld [vmem:[%s455 + $0x1c] sm:$0xf]
        %v495 = vunpack.c.l.b16 %v479
        %v496 = vunpack.c.l.b16 %v480
        %v497 = vunpack.c.l.b16 %v481
        %v498 = vunpack.c.l.b16 %v482
        %v499 = vunpack.c.l.b16 %v483
        %v500 = vunpack.c.l.b16 %v484
        %v501 = vunpack.c.l.b16 %v485
        %v502 = vunpack.c.l.b16 %v486
        %v503 = vpack.c.b16 %v496, %v495
        %v504 = vpack.c.b16 %v498, %v497
        %v505 = vpack.c.b16 %v500, %v499
        %v506 = vpack.c.b16 %v502, %v501
        %v515 = vunpack.c.l.b16 %v471
        %v516 = vunpack.c.l.b16 %v472
        %v517 = vunpack.c.l.b16 %v473
        %v518 = vunpack.c.l.b16 %v474
        %v519 = vunpack.c.l.b16 %v475
        %v520 = vunpack.c.l.b16 %v476
        %v521 = vunpack.c.l.b16 %v477
        %v522 = vunpack.c.l.b16 %v478
        %v523 = vpack.c.b16 %v516, %v515
        %v524 = vpack.c.b16 %v518, %v517
        %v525 = vpack.c.b16 %v520, %v519
        %v526 = vpack.c.b16 %v522, %v521
        %527 = vrot.lane.b32.xlu0 %v523, 16
        %v528 = vpop.permute.xlu0 %527
        %529 = vrot.lane.b32.xlu0 %v524, 16
        %v530 = vpop.permute.xlu0 %529
        %531 = vrot.lane.b32.xlu0 %v525, 16
        %v532 = vpop.permute.xlu0 %531
        %533 = vrot.lane.b32.xlu0 %v526, 16
        %v534 = vpop.permute.xlu0 %533
        %vm535 = vcmask 130048
        %v538 = vsel %vm535, %v503, %v528
        %v542 = vsel %vm535, %v504, %v530
        %v546 = vsel %vm535, %v505, %v532
        %v550 = vsel %vm535, %v506, %v534
        %v552 = vld [vmem:[%s464] sm:$0xf]
        %v553 = vld [vmem:[%s464 + $0x4] sm:$0xf]
        %v554 = vld [vmem:[%s464 + $0x8] sm:$0xf]
        %v555 = vld [vmem:[%s464 + $0xc] sm:$0xf]
        %v556 = vld [vmem:[%s464 + $0x10] sm:$0xf]
        %v557 = vld [vmem:[%s464 + $0x14] sm:$0xf]
        %v558 = vld [vmem:[%s464 + $0x18] sm:$0xf]
        %v559 = vld [vmem:[%s464 + $0x1c] sm:$0xf]
        %560 = vrot.lane.b32.xlu0 %v523, 112
        %v561 = vpop.permute.xlu0 %560
        %562 = vrot.lane.b32.xlu0 %v524, 112
        %v563 = vpop.permute.xlu0 %562
        %564 = vrot.lane.b32.xlu0 %v525, 112
        %v565 = vpop.permute.xlu0 %564
        %566 = vrot.lane.b32.xlu0 %v526, 112
        %v567 = vpop.permute.xlu0 %566
        %v576 = vunpack.c.l.b16 %v552
        %v577 = vunpack.c.l.b16 %v553
        %v578 = vunpack.c.l.b16 %v554
        %v579 = vunpack.c.l.b16 %v555
        %v580 = vunpack.c.l.b16 %v556
        %v581 = vunpack.c.l.b16 %v557
        %v582 = vunpack.c.l.b16 %v558
        %v583 = vunpack.c.l.b16 %v559
        %v584 = vpack.c.b16 %v577, %v576
        %v585 = vpack.c.b16 %v579, %v578
        %v586 = vpack.c.b16 %v581, %v580
        %v587 = vpack.c.b16 %v583, %v582
        %588 = vrot.lane.b32.xlu0 %v584, 112
        %v589 = vpop.permute.xlu0 %588
        %590 = vrot.lane.b32.xlu0 %v585, 112
        %v591 = vpop.permute.xlu0 %590
        %592 = vrot.lane.b32.xlu0 %v586, 112
        %v593 = vpop.permute.xlu0 %592
        %594 = vrot.lane.b32.xlu0 %v587, 112
        %v595 = vpop.permute.xlu0 %594
        %vm596 = vcmask 916480
        %v599 = vsel %vm596, %v561, %v589
        %v603 = vsel %vm596, %v563, %v591
        %v607 = vsel %vm596, %v565, %v593
        %v611 = vsel %vm596, %v567, %v595
        %v613 = vld [vmem:[%s3] sm:$0xf]
        %v614 = vld [vmem:[%s3 + $0x4] sm:$0xf]
        %v615 = vld [vmem:[%s3 + $0x8] sm:$0xf]
        %v616 = vld [vmem:[%s3 + $0xc] sm:$0xf]
        %s617 = scalar_lea.vmem %s3, 48
        %v618 = vld [vmem:[%s617] sm:$0xf]
        %v619 = vld [vmem:[%s617 + $0x4] sm:$0xf]
        %v620 = vld [vmem:[%s617 + $0x8] sm:$0xf]
        %v621 = vld [vmem:[%s617 + $0xc] sm:$0xf]
        %v626 = vunpack.c.l.b16 %v618
        %v627 = vunpack.c.l.b16 %v619
        %v628 = vunpack.c.l.b16 %v620
        %v629 = vunpack.c.l.b16 %v621
        %v630 = vpack.c.b16 %v627, %v626
        %v631 = vpack.c.b16 %v629, %v628
        %vm636 = vcmask 523264
        %v638 = vsel %vm636, %v630, 0
        %v641 = vsel %vm636, %v631, 0
        %643 = vmatpush.bf16.msra.mxu0 0
        %644 = vmatpush.bf16.msra.mxu0 0
        %645 = vmatpush.bf16.msra.mxu0 0
        %646 = vmatpush.bf16.msra.mxu0 0
        %647 = vmatpush.bf16.msra.mxu0 %v526
        %648 = vmatpush.bf16.msra.mxu0 %v525
        %649 = vmatpush.bf16.msra.mxu0 %v524
        %650 = vmatpush.bf16.msra.mxu0 %v523
        %651 = vmatmul.bf16.gmra.mxu0 %v638
        %v652 = vpop.f32.mrf.mxu0
        %v653 = vadd.f32 0.0, %v652
        %v654 = vpop.f32.mrf.mxu0
        %v655 = vadd.f32 0.0, %v654
        %656 = vmatmul.bf16.gmra.mxu0 %v641
        %v657 = vpop.f32.mrf.mxu0
        %v658 = vadd.f32 0.0, %v657
        %v659 = vpop.f32.mrf.mxu0
        %v660 = vadd.f32 0.0, %v659
        %661 = vdwg.mxu0
        %v666 = vunpack.c.l.b16 %v613
        %v667 = vunpack.c.l.b16 %v614
        %v668 = vunpack.c.l.b16 %v615
        %v669 = vunpack.c.l.b16 %v616
        %v670 = vpack.c.b16 %v667, %v666
        %v671 = vpack.c.b16 %v669, %v668
        %v673 = vsel %vm636, %v670, 0
        %v676 = vsel %vm636, %v671, 0
        %678 = vmatpush.bf16.msra.mxu0 0
        %679 = vmatpush.bf16.msra.mxu0 0
        %680 = vmatpush.bf16.msra.mxu0 0
        %681 = vmatpush.bf16.msra.mxu0 0
        %682 = vmatpush.bf16.msra.mxu0 %v550
        %683 = vmatpush.bf16.msra.mxu0 %v546
        %684 = vmatpush.bf16.msra.mxu0 %v542
        %685 = vmatpush.bf16.msra.mxu0 %v538
        %686 = vmatmul.bf16.gmra.mxu0 %v673
        %v687 = vpop.f32.mrf.mxu0
        %v688 = vadd.f32 %v653, %v687
        %v689 = vpop.f32.mrf.mxu0
        %v690 = vadd.f32 %v655, %v689
        %691 = vmatmul.bf16.gmra.mxu0 %v676
        %v692 = vpop.f32.mrf.mxu0
        %v693 = vadd.f32 %v658, %v692
        %v694 = vpop.f32.mrf.mxu0
        %v695 = vadd.f32 %v660, %v694
        %696 = vdwg.mxu0
        %s697 = scalar_lea.vmem %s3, 96
        %v698 = vld [vmem:[%s697] sm:$0xf]
        %v699 = vld [vmem:[%s697 + $0x4] sm:$0xf]
        %v700 = vld [vmem:[%s697 + $0x8] sm:$0xf]
        %v701 = vld [vmem:[%s697 + $0xc] sm:$0xf]
        %v706 = vunpack.c.l.b16 %v698
        %v707 = vunpack.c.l.b16 %v699
        %v708 = vunpack.c.l.b16 %v700
        %v709 = vunpack.c.l.b16 %v701
        %v710 = vpack.c.b16 %v707, %v706
        %v711 = vpack.c.b16 %v709, %v708
        %v713 = vsel %vm636, %v710, 0
        %v716 = vsel %vm636, %v711, 0
        %718 = vmatpush.bf16.msra.mxu0 0
        %719 = vmatpush.bf16.msra.mxu0 0
        %720 = vmatpush.bf16.msra.mxu0 0
        %721 = vmatpush.bf16.msra.mxu0 0
        %722 = vmatpush.bf16.msra.mxu0 %v611
        %723 = vmatpush.bf16.msra.mxu0 %v607
        %724 = vmatpush.bf16.msra.mxu0 %v603
        %725 = vmatpush.bf16.msra.mxu0 %v599
        %726 = vmatmul.bf16.gmra.mxu0 %v713
        %v727 = vpop.f32.mrf.mxu0
        %v728 = vadd.f32 0.0, %v727
        %v729 = vpop.f32.mrf.mxu0
        %v730 = vadd.f32 0.0, %v729
        %731 = vmatmul.bf16.gmra.mxu0 %v716
        %v732 = vpop.f32.mrf.mxu0
        %v733 = vadd.f32 0.0, %v732
        %v734 = vpop.f32.mrf.mxu0
        %v735 = vadd.f32 0.0, %v734
        %736 = vdwg.mxu0
        %v737 = vadd.f32 %v688, %v728
        %v738 = vadd.f32 %v690, %v730
        %v739 = vadd.f32 %v693, %v733
        %v740 = vadd.f32 %v695, %v735
        %s741 = scalar_lea.vmem %s3, 16
        %v742 = vld [vmem:[%s741] sm:$0xf]
        %v743 = vld [vmem:[%s741 + $0x4] sm:$0xf]
        %v744 = vld [vmem:[%s741 + $0x8] sm:$0xf]
        %v745 = vld [vmem:[%s741 + $0xc] sm:$0xf]
        %s746 = scalar_lea.vmem %s3, 64
        %v747 = vld [vmem:[%s746] sm:$0xf]
        %v748 = vld [vmem:[%s746 + $0x4] sm:$0xf]
        %v749 = vld [vmem:[%s746 + $0x8] sm:$0xf]
        %v750 = vld [vmem:[%s746 + $0xc] sm:$0xf]
        %v755 = vunpack.c.l.b16 %v747
        %v756 = vunpack.c.l.b16 %v748
        %v757 = vunpack.c.l.b16 %v749
        %v758 = vunpack.c.l.b16 %v750
        %v759 = vpack.c.b16 %v756, %v755
        %v760 = vpack.c.b16 %v758, %v757
        %v762 = vsel %vm636, %v759, 0
        %v765 = vsel %vm636, %v760, 0
        %767 = vmatpush.bf16.msra.mxu0 0
        %768 = vmatpush.bf16.msra.mxu0 0
        %769 = vmatpush.bf16.msra.mxu0 0
        %770 = vmatpush.bf16.msra.mxu0 0
        %771 = vmatpush.bf16.msra.mxu0 %v526
        %772 = vmatpush.bf16.msra.mxu0 %v525
        %773 = vmatpush.bf16.msra.mxu0 %v524
        %774 = vmatpush.bf16.msra.mxu0 %v523
        %775 = vmatmul.bf16.gmra.mxu0 %v762
        %v776 = vpop.f32.mrf.mxu0
        %v777 = vadd.f32 0.0, %v776
        %v778 = vpop.f32.mrf.mxu0
        %v779 = vadd.f32 0.0, %v778
        %780 = vmatmul.bf16.gmra.mxu0 %v765
        %v781 = vpop.f32.mrf.mxu0
        %v782 = vadd.f32 0.0, %v781
        %v783 = vpop.f32.mrf.mxu0
        %v784 = vadd.f32 0.0, %v783
        %785 = vdwg.mxu0
        %v790 = vunpack.c.l.b16 %v742
        %v791 = vunpack.c.l.b16 %v743
        %v792 = vunpack.c.l.b16 %v744
        %v793 = vunpack.c.l.b16 %v745
        %v794 = vpack.c.b16 %v791, %v790
        %v795 = vpack.c.b16 %v793, %v792
        %v797 = vsel %vm636, %v794, 0
        %v800 = vsel %vm636, %v795, 0
        %802 = vmatpush.bf16.msra.mxu0 0
        %803 = vmatpush.bf16.msra.mxu0 0
        %804 = vmatpush.bf16.msra.mxu0 0
        %805 = vmatpush.bf16.msra.mxu0 0
        %806 = vmatpush.bf16.msra.mxu0 %v550
        %807 = vmatpush.bf16.msra.mxu0 %v546
        %808 = vmatpush.bf16.msra.mxu0 %v542
        %809 = vmatpush.bf16.msra.mxu0 %v538
        %810 = vmatmul.bf16.gmra.mxu0 %v797
        %v811 = vpop.f32.mrf.mxu0
        %v812 = vadd.f32 %v777, %v811
        %v813 = vpop.f32.mrf.mxu0
        %v814 = vadd.f32 %v779, %v813
        %815 = vmatmul.bf16.gmra.mxu0 %v800
        %v816 = vpop.f32.mrf.mxu0
        %v817 = vadd.f32 %v782, %v816
        %v818 = vpop.f32.mrf.mxu0
        %v819 = vadd.f32 %v784, %v818
        %820 = vdwg.mxu0
        %s821 = scalar_lea.vmem %s3, 112
        %v822 = vld [vmem:[%s821] sm:$0xf]
        %v823 = vld [vmem:[%s821 + $0x4] sm:$0xf]
        %v824 = vld [vmem:[%s821 + $0x8] sm:$0xf]
        %v825 = vld [vmem:[%s821 + $0xc] sm:$0xf]
        %v830 = vunpack.c.l.b16 %v822
        %v831 = vunpack.c.l.b16 %v823
        %v832 = vunpack.c.l.b16 %v824
        %v833 = vunpack.c.l.b16 %v825
        %v834 = vpack.c.b16 %v831, %v830
        %v835 = vpack.c.b16 %v833, %v832
        %v837 = vsel %vm636, %v834, 0
        %v840 = vsel %vm636, %v835, 0
        %842 = vmatpush.bf16.msra.mxu0 0
        %843 = vmatpush.bf16.msra.mxu0 0
        %844 = vmatpush.bf16.msra.mxu0 0
        %845 = vmatpush.bf16.msra.mxu0 0
        %846 = vmatpush.bf16.msra.mxu0 %v611
        %847 = vmatpush.bf16.msra.mxu0 %v607
        %848 = vmatpush.bf16.msra.mxu0 %v603
        %849 = vmatpush.bf16.msra.mxu0 %v599
        %850 = vmatmul.bf16.gmra.mxu0 %v837
        %v851 = vpop.f32.mrf.mxu0
        %v852 = vadd.f32 0.0, %v851
        %v853 = vpop.f32.mrf.mxu0
        %v854 = vadd.f32 0.0, %v853
        %855 = vmatmul.bf16.gmra.mxu0 %v840
        %v856 = vpop.f32.mrf.mxu0
        %v857 = vadd.f32 0.0, %v856
        %v858 = vpop.f32.mrf.mxu0
        %v859 = vadd.f32 0.0, %v858
        %860 = vdwg.mxu0
        %v861 = vadd.f32 %v812, %v852
        %v862 = vadd.f32 %v814, %v854
        %v863 = vadd.f32 %v817, %v857
        %v864 = vadd.f32 %v819, %v859
        %s865 = scalar_lea.vmem %s3, 32
        %v866 = vld [vmem:[%s865] sm:$0xf]
        %v867 = vld [vmem:[%s865 + $0x4] sm:$0xf]
        %v868 = vld [vmem:[%s865 + $0x8] sm:$0xf]
        %v869 = vld [vmem:[%s865 + $0xc] sm:$0xf]
        %s870 = scalar_lea.vmem %s3, 80
        %v871 = vld [vmem:[%s870] sm:$0xf]
        %v872 = vld [vmem:[%s870 + $0x4] sm:$0xf]
        %v873 = vld [vmem:[%s870 + $0x8] sm:$0xf]
        %v874 = vld [vmem:[%s870 + $0xc] sm:$0xf]
        %v879 = vunpack.c.l.b16 %v871
        %v880 = vunpack.c.l.b16 %v872
        %v881 = vunpack.c.l.b16 %v873
        %v882 = vunpack.c.l.b16 %v874
        %v883 = vpack.c.b16 %v880, %v879
        %v884 = vpack.c.b16 %v882, %v881
        %v886 = vsel %vm636, %v883, 0
        %v889 = vsel %vm636, %v884, 0
        %891 = vmatpush.bf16.msra.mxu0 0
        %892 = vmatpush.bf16.msra.mxu0 0
        %893 = vmatpush.bf16.msra.mxu0 0
        %894 = vmatpush.bf16.msra.mxu0 0
        %895 = vmatpush.bf16.msra.mxu0 %v526
        %896 = vmatpush.bf16.msra.mxu0 %v525
        %897 = vmatpush.bf16.msra.mxu0 %v524
        %898 = vmatpush.bf16.msra.mxu0 %v523
        %899 = vmatmul.bf16.gmra.mxu0 %v886
        %v900 = vpop.f32.mrf.mxu0
        %v901 = vadd.f32 0.0, %v900
        %v902 = vpop.f32.mrf.mxu0
        %v903 = vadd.f32 0.0, %v902
        %904 = vmatmul.bf16.gmra.mxu0 %v889
        %v905 = vpop.f32.mrf.mxu0
        %v906 = vadd.f32 0.0, %v905
        %v907 = vpop.f32.mrf.mxu0
        %v908 = vadd.f32 0.0, %v907
        %909 = vdwg.mxu0
        %v914 = vunpack.c.l.b16 %v866
        %v915 = vunpack.c.l.b16 %v867
        %v916 = vunpack.c.l.b16 %v868
        %v917 = vunpack.c.l.b16 %v869
        %v918 = vpack.c.b16 %v915, %v914
        %v919 = vpack.c.b16 %v917, %v916
        %v921 = vsel %vm636, %v918, 0
        %v924 = vsel %vm636, %v919, 0
        %926 = vmatpush.bf16.msra.mxu0 0
        %927 = vmatpush.bf16.msra.mxu0 0
        %928 = vmatpush.bf16.msra.mxu0 0
        %929 = vmatpush.bf16.msra.mxu0 0
        %930 = vmatpush.bf16.msra.mxu0 %v550
        %931 = vmatpush.bf16.msra.mxu0 %v546
        %932 = vmatpush.bf16.msra.mxu0 %v542
        %933 = vmatpush.bf16.msra.mxu0 %v538
        %934 = vmatmul.bf16.gmra.mxu0 %v921
        %v935 = vpop.f32.mrf.mxu0
        %v936 = vadd.f32 %v901, %v935
        %v937 = vpop.f32.mrf.mxu0
        %v938 = vadd.f32 %v903, %v937
        %939 = vmatmul.bf16.gmra.mxu0 %v924
        %v940 = vpop.f32.mrf.mxu0
        %v941 = vadd.f32 %v906, %v940
        %v942 = vpop.f32.mrf.mxu0
        %v943 = vadd.f32 %v908, %v942
        %944 = vdwg.mxu0
        %s945 = scalar_lea.vmem %s3, 128
        %v946 = vld [vmem:[%s945] sm:$0xf]
        %v947 = vld [vmem:[%s945 + $0x4] sm:$0xf]
        %v948 = vld [vmem:[%s945 + $0x8] sm:$0xf]
        %v949 = vld [vmem:[%s945 + $0xc] sm:$0xf]
        %v954 = vunpack.c.l.b16 %v946
        %v955 = vunpack.c.l.b16 %v947
        %v956 = vunpack.c.l.b16 %v948
        %v957 = vunpack.c.l.b16 %v949
        %v958 = vpack.c.b16 %v955, %v954
        %v959 = vpack.c.b16 %v957, %v956
        %v961 = vsel %vm636, %v958, 0
        %v964 = vsel %vm636, %v959, 0
        %966 = vmatpush.bf16.msra.mxu0 0
        %967 = vmatpush.bf16.msra.mxu0 0
        %968 = vmatpush.bf16.msra.mxu0 0
        %969 = vmatpush.bf16.msra.mxu0 0
        %970 = vmatpush.bf16.msra.mxu0 %v611
        %971 = vmatpush.bf16.msra.mxu0 %v607
        %972 = vmatpush.bf16.msra.mxu0 %v603
        %973 = vmatpush.bf16.msra.mxu0 %v599
        %974 = vmatmul.bf16.gmra.mxu0 %v961
        %v975 = vpop.f32.mrf.mxu0
        %v976 = vadd.f32 0.0, %v975
        %v977 = vpop.f32.mrf.mxu0
        %v978 = vadd.f32 0.0, %v977
        %979 = vmatmul.bf16.gmra.mxu0 %v964
        %v980 = vpop.f32.mrf.mxu0
        %v981 = vadd.f32 0.0, %v980
        %v982 = vpop.f32.mrf.mxu0
        %v983 = vadd.f32 0.0, %v982
        %984 = vdwg.mxu0
        %v985 = vadd.f32 %v936, %v976
        %v986 = vadd.f32 %v938, %v978
        %v987 = vadd.f32 %v941, %v981
        %v988 = vadd.f32 %v943, %v983
        %v989 = vlaneseq
        %v990 = vand.u32 %v989, 127
        %vm991 = vcmp.lt.s32.totalorder %v990, 0
        %v992 = vsub.s32 0, %v990
        %v993 = vsel %vm991, %v992, %v990
        %v994 = vshrl.u32 %v993, 4
        %v995 = vand.u32 %v993, 15
        %v996 = vsub.s32 0, %v995
        %v997 = vsel %vm991, %v996, %v995
        %vm998 = vcmp.ne.s32.totalorder %v997, 0
        %vm999 = vcmp.lt.s32.totalorder %v997, 0
        %vm1000 = vmand %vm999, %vm998
        %v1001 = vadd.s32 %v997, 16
        %v1002 = vsel %vm1000, %v1001, %v997
        %1007 = vrot.lane.b32.xlu0 %v737, 1
        %v1008 = vpop.permute.xlu0 %1007
        %1009 = vrot.lane.b32.xlu0 %v738, 1
        %v1010 = vpop.permute.xlu0 %1009
        %1011 = vrot.lane.b32.xlu0 %v739, 1
        %v1012 = vpop.permute.xlu0 %1011
        %1013 = vrot.lane.b32.xlu0 %v740, 1
        %v1014 = vpop.permute.xlu0 %1013
        %vm1019 = vcmask 7168
        %1024 = vrot.lane.b32.xlu0 %v985, 127
        %v1025 = vpop.permute.xlu0 %1024
        %1026 = vrot.lane.b32.xlu0 %v986, 127
        %v1027 = vpop.permute.xlu0 %1026
        %1028 = vrot.lane.b32.xlu0 %v987, 127
        %v1029 = vpop.permute.xlu0 %1028
        %1030 = vrot.lane.b32.xlu0 %v988, 127
        %v1031 = vpop.permute.xlu0 %1030
        %vm1036 = vcmp.ne.s32.totalorder %v1002, 0
        %v1037 = vsel %vm1036, %v1008, 0.0
        %v1038 = vsel %vm1036, %v1010, 0.0
        %v1039 = vsel %vm1036, %v1012, 0.0
        %v1040 = vsel %vm1036, %v1014, 0.0
        %v1041 = vadd.f32 %v861, %v1037
        %v1042 = vadd.f32 %v862, %v1038
        %v1043 = vadd.f32 %v863, %v1039
        %v1044 = vadd.f32 %v864, %v1040
        %vm1045 = vcmp.ne.s32.totalorder %v1002, 15
        %v1046 = vsel %vm1045, %v1025, 0.0
        %v1047 = vsel %vm1045, %v1027, 0.0
        %v1048 = vsel %vm1045, %v1029, 0.0
        %v1049 = vsel %vm1045, %v1031, 0.0
        %v1050 = vadd.f32 %v1041, %v1046
        %v1051 = vadd.f32 %v1042, %v1047
        %v1052 = vadd.f32 %v1043, %v1048
        %v1053 = vadd.f32 %v1044, %v1049
        %v1054 = vld [vmem:[%s4] sm:$0xff]
        %v1055 = vld [vmem:[%s4 + $0x8] sm:$0xff]
        %v1056 = vld [vmem:[%s4 + $0x10] sm:$0xff]
        %v1057 = vld [vmem:[%s4 + $0x18] sm:$0xff]
        %1059 = vset.pattern.permute.xlu0 0
        %1060 = vperm.xlu0 %1059, %v1054
        %v1061 = vpop.permute.xlu0 %1060
        %1064 = vset.pattern.permute.xlu0 0
        %1065 = vperm.xlu0 %1064, %v1055
        %v1066 = vpop.permute.xlu0 %1065
        %1069 = vset.pattern.permute.xlu0 0
        %1070 = vperm.xlu0 %1069, %v1056
        %v1071 = vpop.permute.xlu0 %1070
        %1074 = vset.pattern.permute.xlu0 0
        %1075 = vperm.xlu0 %1074, %v1057
        %v1076 = vpop.permute.xlu0 %1075
        %v1078 = vadd.f32 %v1050, %v1061
        %v1079 = vadd.f32 %v1051, %v1066
        %v1080 = vadd.f32 %v1052, %v1071
        %v1081 = vadd.f32 %v1053, %v1076
        %v1082 = vmax.f32 %v1078, 0.0
        %v1083 = vmax.f32 %v1079, 0.0
        %v1084 = vmax.f32 %v1080, 0.0
        %v1085 = vmax.f32 %v1081, 0.0
        %v1086 = vld [vmem:[%s5] sm:$0xf]
        %v1087 = vld [vmem:[%s5 + $0x4] sm:$0xf]
        %v1088 = vld [vmem:[%s5 + $0x8] sm:$0xf]
        %v1089 = vld [vmem:[%s5 + $0xc] sm:$0xf]
        %v1090 = vpack.c.bf16 %v1083, %v1082
        %v1091 = vpack.c.bf16 %v1085, %v1084
        %v1092 = vld [vmem:[%s6] sm:$0xff]
        %v1093 = vld [vmem:[%s6 + $0x8] sm:$0xff]
        %v1094 = vld [vmem:[%s6 + $0x10] sm:$0xff]
        %v1095 = vld [vmem:[%s6 + $0x18] sm:$0xff]
        %1097 = vset.pattern.permute.xlu0 0
        %1098 = vperm.xlu0 %1097, %v1092
        %v1099 = vpop.permute.xlu0 %1098
        %1102 = vset.pattern.permute.xlu0 0
        %1103 = vperm.xlu0 %1102, %v1093
        %v1104 = vpop.permute.xlu0 %1103
        %1107 = vset.pattern.permute.xlu0 0
        %1108 = vperm.xlu0 %1107, %v1094
        %v1109 = vpop.permute.xlu0 %1108
        %1112 = vset.pattern.permute.xlu0 0
        %1113 = vperm.xlu0 %1112, %v1095
        %v1114 = vpop.permute.xlu0 %1113
        %v1120 = vunpack.c.l.b16 %v1086
        %v1121 = vunpack.c.l.b16 %v1087
        %v1122 = vunpack.c.l.b16 %v1088
        %v1123 = vunpack.c.l.b16 %v1089
        %v1124 = vpack.c.b16 %v1121, %v1120
        %v1125 = vpack.c.b16 %v1123, %v1122
        %vm1126 = vcmask 261120
        %v1128 = vsel %vm1126, %v1124, 0
        %v1131 = vsel %vm1126, %v1125, 0
        %1133 = vmatpush.bf16.msra.mxu0 0
        %1134 = vmatpush.bf16.msra.mxu0 0
        %1135 = vmatpush.bf16.msra.mxu0 0
        %1136 = vmatpush.bf16.msra.mxu0 0
        %1137 = vmatpush.bf16.msra.mxu0 0
        %1138 = vmatpush.bf16.msra.mxu0 0
        %1139 = vmatpush.bf16.msra.mxu0 %v1091
        %1140 = vmatpush.bf16.msra.mxu0 %v1090
        %1141 = vmatmul.bf16.gmra.mxu0 %v1128
        %v1142 = vpop.f32.mrf.mxu0
        %v1143 = vadd.f32 %v1099, %v1142
        %v1144 = vpop.f32.mrf.mxu0
        %v1145 = vadd.f32 %v1104, %v1144
        %1146 = vmatmul.bf16.gmra.mxu0 %v1131
        %v1147 = vpop.f32.mrf.mxu0
        %v1148 = vadd.f32 %v1109, %v1147
        %v1149 = vpop.f32.mrf.mxu0
        %v1150 = vadd.f32 %v1114, %v1149
        %1151 = vdwg.mxu0
        %v1152 = vmax.f32 %v1143, 0.0
        %v1153 = vmax.f32 %v1145, 0.0
        %v1154 = vmax.f32 %v1148, 0.0
        %v1155 = vmax.f32 %v1150, 0.0
        %v1156 = vpack.c.bf16 %v1152, %v1152
        %v1157 = vpack.c.bf16 %v1153, %v1153
        %v1158 = vpack.c.bf16 %v1154, %v1154
        %v1159 = vpack.c.bf16 %v1155, %v1155
        %1160 = vst [vmem:[%s439] sm:$0xf] %v1156
        %1161 = vst [vmem:[%s439 + $0x4] sm:$0xf] %v1157
        %1162 = vst [vmem:[%s439 + $0x8] sm:$0xf] %v1158
        %1163 = vst [vmem:[%s439 + $0xc] sm:$0xf] %v1159
        %p1164 = scmp.eq.s32.totalorder %s25, 0
        // Predicated region
        $region90: #{alpha_hb_decoder_forward.2} parent=84 // pred_check
          %p1165 = pneg %p1164
        $region91: #{alpha_hb_decoder_forward.2} parent=84 // pred_check_branch
          %1167 = sbr.rel (%p1165) target = $region93
        $region92: #{alpha_hb_decoder_forward.2} parent=84 // pred_region
          %1168 = vst.msk [vmem:[%s469] sm:$0xff] %vm1019, 0.0
          %1169 = vst.msk [vmem:[%s469 + $0x8] sm:$0xff] %vm1019, 0.0
          %1170 = vst.msk [vmem:[%s469 + $0x10] sm:$0xff] %vm1019, 0.0
          %1171 = vst.msk [vmem:[%s469 + $0x18] sm:$0xff] %vm1019, 0.0
        $region93: #{alpha_hb_decoder_forward.2} parent=84 // pred_fallthru
          _
        %v1172 = vld [vmem:[%s469] sm:$0xff]
        %v1173 = vld [vmem:[%s469 + $0x8] sm:$0xff]
        %v1174 = vld [vmem:[%s469 + $0x10] sm:$0xff]
        %v1175 = vld [vmem:[%s469 + $0x18] sm:$0xff]
        %1176 = vadd.xlane.f32.xlu0 %v1152
        %v1177 = vpop.xlane.xlu0 %1176
        %1178 = vadd.xlane.f32.xlu0 %v1153
        %v1179 = vpop.xlane.xlu0 %1178
        %1180 = vadd.xlane.f32.xlu0 %v1154
        %v1181 = vpop.xlane.xlu0 %1180
        %1182 = vadd.xlane.f32.xlu0 %v1155
        %v1183 = vpop.xlane.xlu0 %1182
        %v1184 = vadd.f32 %v1172, %v1177
        %v1185 = vadd.f32 %v1173, %v1179
        %v1186 = vadd.f32 %v1174, %v1181
        %v1187 = vadd.f32 %v1175, %v1183
        %1188 = vst.msk [vmem:[%s469] sm:$0xff] %vm1019, %v1184
        %1189 = vst.msk [vmem:[%s469 + $0x8] sm:$0xff] %vm1019, %v1185
        %1190 = vst.msk [vmem:[%s469 + $0x10] sm:$0xff] %vm1019, %v1186
        %1191 = vst.msk [vmem:[%s469 + $0x18] sm:$0xff] %vm1019, %v1187
        %s1192 = sand.u32 %s210, 1
        %s1193 = sand.u32 %s210, 1
        %s1194 = smul.addr %s1193, 16
        %s1195 = scalar_lea.vmem [#allocation3], %s1194
        %p1196 = scmp.lt.s32.totalorder %s24, 1
        %s1197 = scalar_select %p1196, %s24, 1
        %s1198 = smul.addr %s1197, 4
        %s1199 = smul.addr %s1198, 8
        %s1200 = scalar_lea.vmem %s8, %s1199
        // Predicated region
        $region94: #{alpha_hb_decoder_forward.2} parent=84 // pred_check
          %p1201 = pneg %p220
        $region95: #{alpha_hb_decoder_forward.2} parent=84 // pred_check_branch
          %1203 = sbr.rel (%p1201) target = $region97
        $region96: #{alpha_hb_decoder_forward.2} parent=84 // pred_region
          %s1204 = smul.addr %s24, 8
          %s1205 = sadd.s32 %s25, %s1204
          %s1206 = smul.addr %s1205, 4
          %s1207 = scalar_lea.vmem %s7, %s1206
          // Predicated region
          $region98: #{alpha_hb_decoder_forward.2} parent=96 // pred_check
            _
          $region99: #{alpha_hb_decoder_forward.2} parent=96 // pred_check_branch
            %1209 = sbr.rel (0) target = $region101
          $region100: #{alpha_hb_decoder_forward.2} parent=96 // pred_region
            // Predicated region
            $region102: #{alpha_hb_decoder_forward.2} parent=100 // pred_check
              _
            $region103: #{alpha_hb_decoder_forward.2} parent=100 // pred_check_branch
              %1211 = sbr.rel target = $region105
            $region104: #{alpha_hb_decoder_forward.2} parent=100 // pred_region
              // Predicated region
              $region117: #{alpha_hb_decoder_forward.2} parent=104 // pred_check
                _
              $region118: #{alpha_hb_decoder_forward.2} parent=104 // pred_check_branch
                %1233 = sbr.rel (0) target = $region120
              $region119: #{alpha_hb_decoder_forward.2} parent=104 // pred_region
                loop: start=0, step=1, limit=1
                $region121: #{alpha_hb_decoder_forward.2} parent=119 // loop_pre_header
                  _
                $region122: #{alpha_hb_decoder_forward.2} parent=119 // loop_header
                  %s1235 = sphi 0, %s1239
                  %p1236 = scmp.ge.s32.totalorder %s1235, 1
                  %s1240 = sphi %s1195, %s1195
                  %s1241 = sphi %s1207, %s1207
                $region123: #{alpha_hb_decoder_forward.2} parent=119 // loop_header_branch
                  %1238 = sbr.rel (%p1236) target = $region127
                $region124: #{alpha_hb_decoder_forward.2} parent=119 // loop_body
                  _
                $region125: #{alpha_hb_decoder_forward.2} parent=119 // loop_footer
                  %s1239 = sadd.s32 1, %s1235
                $region126: #{alpha_hb_decoder_forward.2} parent=119 // loop_footer_branch
                  %1234 = sbr.rel target = $region122
                $region127: #{alpha_hb_decoder_forward.2} parent=119 // loop_exit
                  _
                %s1243 = ssub.s32 16, 1
                loop: start=0, step=1, limit=1
                $region128: #{alpha_hb_decoder_forward.2} parent=119 // loop_pre_header
                  _
                $region129: #{alpha_hb_decoder_forward.2} parent=119 // loop_header
                  %s1245 = sphi 0, %s1249
                  %p1246 = scmp.ge.s32.totalorder %s1245, 1
                  %s1250 = sphi %s1195, %s1195
                  %s1251 = sphi %s1207, %s1207
                $region130: #{alpha_hb_decoder_forward.2} parent=119 // loop_header_branch
                  %1248 = sbr.rel (%p1246) target = $region134
                $region131: #{alpha_hb_decoder_forward.2} parent=119 // loop_body
                  %v1252 = vld [vmem:[%s1250] sm:%s1243]
                  %1253 = vst [vmem:[%s1251] sm:%s1243] %v1252
                  %v1254 = vld [vmem:[%s1250 + $0x4] sm:%s1243]
                  %1255 = vst [vmem:[%s1251 + $0x8] sm:%s1243] %v1254
                  %v1256 = vld [vmem:[%s1250 + $0x8] sm:%s1243]
                  %1257 = vst [vmem:[%s1251 + $0x10] sm:%s1243] %v1256
                  %v1258 = vld [vmem:[%s1250 + $0xc] sm:%s1243]
                  %1259 = vst [vmem:[%s1251 + $0x18] sm:%s1243] %v1258
                $region132: #{alpha_hb_decoder_forward.2} parent=119 // loop_footer
                  %s1249 = sadd.s32 1, %s1245
                $region133: #{alpha_hb_decoder_forward.2} parent=119 // loop_footer_branch
                  %1244 = sbr.rel target = $region129
                $region134: #{alpha_hb_decoder_forward.2} parent=119 // loop_exit
                  _
              $region120: #{alpha_hb_decoder_forward.2} parent=104 // pred_fallthru
                _
            $region105: #{alpha_hb_decoder_forward.2} parent=100 // pred_fallthru
              _
            // Predicated region
            $region106: #{alpha_hb_decoder_forward.2} parent=100 // pred_check
              _
            $region107: #{alpha_hb_decoder_forward.2} parent=100 // pred_check_branch
              %1213 = sbr.rel (0) target = $region109
            $region108: #{alpha_hb_decoder_forward.2} parent=100 // pred_region
              %s1215 = ssub.s32 16, 1
              loop: start=0, step=1, limit=1
              $region110: #{alpha_hb_decoder_forward.2} parent=108 // loop_pre_header
                _
              $region111: #{alpha_hb_decoder_forward.2} parent=108 // loop_header
                %s1217 = sphi 0, %s1221
                %p1218 = scmp.ge.s32.totalorder %s1217, 1
                %s1222 = sphi %s1195, %s1195
                %s1223 = sphi %s1207, %s1207
              $region112: #{alpha_hb_decoder_forward.2} parent=108 // loop_header_branch
                %1220 = sbr.rel (%p1218) target = $region116
              $region113: #{alpha_hb_decoder_forward.2} parent=108 // loop_body
                %v1224 = vld [vmem:[%s1222] sm:%s1215]
                %1225 = vst [vmem:[%s1223] sm:%s1215] %v1224
                %v1226 = vld [vmem:[%s1222 + $0x4] sm:%s1215]
                %1227 = vst [vmem:[%s1223 + $0x8] sm:%s1215] %v1226
                %v1228 = vld [vmem:[%s1222 + $0x8] sm:%s1215]
                %1229 = vst [vmem:[%s1223 + $0x10] sm:%s1215] %v1228
                %v1230 = vld [vmem:[%s1222 + $0xc] sm:%s1215]
                %1231 = vst [vmem:[%s1223 + $0x18] sm:%s1215] %v1230
              $region114: #{alpha_hb_decoder_forward.2} parent=108 // loop_footer
                %s1221 = sadd.s32 1, %s1217
              $region115: #{alpha_hb_decoder_forward.2} parent=108 // loop_footer_branch
                %1216 = sbr.rel target = $region111
              $region116: #{alpha_hb_decoder_forward.2} parent=108 // loop_exit
                _
            $region109: #{alpha_hb_decoder_forward.2} parent=100 // pred_fallthru
              _
          $region101: #{alpha_hb_decoder_forward.2} parent=96 // pred_fallthru
            _
          %1260 = vnop
        $region97: #{alpha_hb_decoder_forward.2} parent=84 // pred_fallthru
          _
        // Predicated region
        $region135: #{alpha_hb_decoder_forward.2} parent=84 // pred_check
          %p1261 = pneg %p246
        $region136: #{alpha_hb_decoder_forward.2} parent=84 // pred_check_branch
          %1263 = sbr.rel (%p1261) target = $region138
        $region137: #{alpha_hb_decoder_forward.2} parent=84 // pred_region
          _
        $region138: #{alpha_hb_decoder_forward.2} parent=84 // pred_fallthru
          _
      $region85: #{alpha_hb_decoder_forward.2} parent=5 // pred_fallthru
        _
      %p1264 = scmp.le.s32.totalorder 2, %s15
      // Predicated region
      $region139: #{alpha_hb_decoder_forward.2} parent=5 // pred_check
        %p1265 = pneg %p1264
      $region140: #{alpha_hb_decoder_forward.2} parent=5 // pred_check_branch
        %1267 = sbr.rel (%p1265) target = $region142
      $region141: #{alpha_hb_decoder_forward.2} parent=5 // pred_region
        %s1268 = ssub.s32 %s15, 2
        // Predicated region
        $region143: #{alpha_hb_decoder_forward.2} parent=141 // pred_check
          %p1269 = pneg %p226
        $region144: #{alpha_hb_decoder_forward.2} parent=141 // pred_check_branch
          %1271 = sbr.rel (%p1269) target = $region146
        $region145: #{alpha_hb_decoder_forward.2} parent=141 // pred_region
          %s1272 = sand.u32 %s211, 1
          %s1273 = sand.u32 %s211, 1
          %s1274 = smul.addr %s1273, 16
          %s1275 = scalar_lea.vmem [#allocation3], %s1274
        $region146: #{alpha_hb_decoder_forward.2} parent=141 // pred_fallthru
          _
        // Predicated region
        $region147: #{alpha_hb_decoder_forward.2} parent=141 // pred_check
          %p1276 = pneg %p252
        $region148: #{alpha_hb_decoder_forward.2} parent=141 // pred_check_branch
          %1278 = sbr.rel (%p1276) target = $region150
        $region149: #{alpha_hb_decoder_forward.2} parent=141 // pred_region
          %p1279 = scmp.lt.s32.totalorder %s26, 1
          %s1280 = scalar_select %p1279, %s26, 1
          %s1281 = smul.addr %s1280, 4
          %s1282 = smul.addr %s1281, 8
          %s1283 = scalar_lea.vmem %s8, %s1282
        $region150: #{alpha_hb_decoder_forward.2} parent=141 // pred_fallthru
          _
      $region142: #{alpha_hb_decoder_forward.2} parent=5 // pred_fallthru
        _
    $region6: #{alpha_hb_decoder_forward.2} parent=1 // loop_footer
      %s19 = sadd.s32 1, %s15
    $region7: #{alpha_hb_decoder_forward.2} parent=1 // loop_footer_branch
      %14 = sbr.rel target = $region3
    $region8: #{alpha_hb_decoder_forward.2} parent=1 // loop_exit
      _

</llo_original>
